<compile_context>
chip_gen: v6e
topology: v6e:2x2x1
jax: 0.10.0
libtpu: 0.0.40
codegen_flags: <defaults>
</compile_context>

<pallas_src>
import math

import jax
import jax.numpy as jnp
from jax.experimental import pallas as pl
from jax.experimental.pallas import tpu as pltpu


# ----------------------------------- helpers ---------------------------------------

def _round_up(x, m):
    return ((x + m - 1) // m) * m


def _vmem_capacity_bytes():
    try:
        return int(pltpu.get_tpu_info().vmem_capacity_bytes)
    except Exception:
        return 64 << 20          # conservative fallback (v7x physical VMEM)


def _plan(T, Bb, Dp, Hp, Cp, L, act_bytes=2, w_bytes=2, max_chunk=128):
    """Pick the largest time chunk (divisor of T, <= max_chunk) whose VMEM footprint
    fits the per-generation budget, and a vmem_limit_bytes consistent with it."""
    cap = _vmem_capacity_bytes()
    budget = (cap * 3) // 4       # leave headroom for compiler scratch / semaphores

    # Resident weights (the default pipeline double-buffers them even with constant
    # index maps) + fc head + f32 biases.
    w_elems = Dp * 4 * Hp + (L - 1) * Hp * 4 * Hp + L * Hp * 4 * Hp + Hp * Cp
    weights = 2 * (w_elems * w_bytes + L * 4 * Hp * 4 + Cp * 4)
    state = 2 * L * Bb * Hp * 4                          # (h, c) f32 carries
    out_blk = 2 * Bb * Cp * 4                            # double-buffered output blk
    fixed = weights + state + out_blk

    def need(tc):
        x_blk = 2 * tc * Bb * Dp * act_bytes             # double-buffered input chunk
        gx = tc * Bb * 4 * Hp * 4                        # f32 pre-activation scratch
        seq = tc * Bb * Hp * act_bytes if L > 1 else 0   # bf16 inter-layer activations
        return fixed + x_blk + gx + seq

    chunk = 1
    for c in range(1, min(T, max_chunk) + 1):
        if T % c == 0 and need(c) <= budget:
            chunk = c
    limit = int(min(max(need(chunk) * 5 // 4, 32 << 20), budget))
    return chunk, limit


def _pad_gate_matrix(w_t, d_in_pad, h, h_pad):
    """(d_in, 4h) -> (d_in_pad, 4*h_pad) with each gate's column block zero-padded."""
    d_in = w_t.shape[0]
    w4 = w_t.reshape(d_in, 4, h)
    w4 = jnp.pad(w4, ((0, d_in_pad - d_in), (0, 0), (0, h_pad - h)))
    return w4.reshape(d_in_pad, 4 * h_pad)


def _pad_gate_bias(b, h, h_pad):
    """(1, 4h) -> (1, 4*h_pad) with per-gate zero padding."""
    b4 = b.reshape(4, h)
    b4 = jnp.pad(b4, ((0, 0), (0, h_pad - h)))
    return b4.reshape(1, 4 * h_pad)


# ----------------------------------- fused kernel ----------------------------------

def _make_fused_kernel(*, L, Tc, Bb, Dp, Hp, Cp, has_seq):
    """One kernel for the whole model: L LSTM layers + fc head, per time chunk."""

    def kernel(*refs):
        x_ref = refs[0]                           # (Tc, Bb, Dp) bf16, time-major
        layer_refs = refs[1:1 + 3 * L]            # per layer: w_ih, w_hh, bias
        wfc_ref = refs[1 + 3 * L]                 # (Hp, Cp) bf16
        bfc_ref = refs[2 + 3 * L]                 # (1, Cp)  f32
        out_ref = refs[3 + 3 * L]                 # (Bb, Cp) f32
        h_sc = refs[4 + 3 * L]                    # (L, Bb, Hp) f32
        c_sc = refs[5 + 3 * L]                    # (L, Bb, Hp) f32
        gx_sc = refs[6 + 3 * L]                   # (Tc, Bb, 4*Hp) f32
        seq_sc = refs[7 + 3 * L] if has_seq else None   # (Tc, Bb, Hp) bf16

        c_id = pl.program_id(1)                   # time-chunk index (inner, serial)

        @pl.when(c_id == 0)
        def _init():
            h_sc[...] = jnp.zeros_like(h_sc)
            c_sc[...] = jnp.zeros_like(c_sc)

        def run_layer(l, xs_2d, write_seq):
            """One LSTM layer over the chunk. xs_2d: (Tc*Bb, d_in) bf16 time-major."""
            wih = layer_refs[3 * l][...]
            whh = layer_refs[3 * l + 1][...]
            bias = layer_refs[3 * l + 2][...]

            # Chunk-level input projection with the bias folded in: ONE MXU matmul
            # per layer per chunk, bias broadcast/added once (not per step).
            gx = jnp.dot(xs_2d, wih, preferred_element_type=jnp.float32) + bias
            gx_sc[...] = gx.reshape(Tc, Bb, 4 * Hp)

            def step(k, carry):
                h, c = carry
                # Step k is the contiguous, aligned (Bb, 4*Hp) slab of the chunk.
                gates = gx_sc[k] + jnp.dot(h.astype(whh.dtype), whh,
                                           preferred_element_type=jnp.float32)
                # PyTorch gate order i, f, g, o; i|f are lane-contiguous -> one wide
                # sigmoid, then tanh(g), sigmoid(o): 3 EUP issues per step.
                i_f = jax.nn.sigmoid(gates[:, 0:2 * Hp])
                g = jnp.tanh(gates[:, 2 * Hp:3 * Hp])
                o = jax.nn.sigmoid(gates[:, 3 * Hp:4 * Hp])
                c_new = i_f[:, Hp:2 * Hp] * c + i_f[:, 0:Hp] * g
                h_new = o * jnp.tanh(c_new)
                if write_seq:
                    seq_sc[k] = h_new.astype(seq_sc.dtype)
                return h_new, c_new

            h, c = jax.lax.fori_loop(0, Tc, step, (h_sc[l], c_sc[l]))
            h_sc[l] = h
            c_sc[l] = c
            return h

        xs = x_ref[...].reshape(Tc * Bb, Dp)
        h_last = None
        for l in range(L):
            h_last = run_layer(l, xs, write_seq=(l < L - 1))
            if l < L - 1:
                # Inter-layer activations stay in VMEM (never round-trip HBM).
                xs = seq_sc[...].reshape(Tc * Bb, Hp)

        @pl.when(c_id == pl.num_programs(1) - 1)
        def _emit():
            # Dropout is identity in eval mode.
            # TODO(synk): training-mode dropout mask not applied.
            logits = (jnp.dot(h_last.astype(wfc_ref.dtype), wfc_ref[...],
                              preferred_element_type=jnp.float32) + bfc_ref[...])
            out_ref[...] = logits.astype(out_ref.dtype)

    return kernel


# --------------------------------- model wrapper -----------------------------------

def init_params(key, input_dim, hidden_dim, num_layers, n_classes,
                param_dtype=jnp.bfloat16):
    params = {"lstm": []}
    k = 1.0 / math.sqrt(hidden_dim)
    for layer in range(num_layers):
        d_in = input_dim if layer == 0 else hidden_dim
        key, k1, k2, k3, k4 = jax.random.split(key, 5)
        w_ih = jax.random.uniform(k1, (4 * hidden_dim, d_in), jnp.float32, -k, k)
        w_hh = jax.random.uniform(k2, (4 * hidden_dim, hidden_dim), jnp.float32, -k, k)
        b_ih = jax.random.uniform(k3, (4 * hidden_dim,), jnp.float32, -k, k)
        b_hh = jax.random.uniform(k4, (4 * hidden_dim,), jnp.float32, -k, k)
        params["lstm"].append({
            "w_ih_t": w_ih.T.astype(param_dtype),                  # (D_in, 4H) bf16
            "w_hh_t": w_hh.T.astype(param_dtype),                  # (H, 4H)    bf16
            "b": (b_ih + b_hh).reshape(1, 4 * hidden_dim),         # (1, 4H)    f32
        })
    key, k5, k6 = jax.random.split(key, 3)
    w_fc = jax.random.uniform(k5, (n_classes, hidden_dim), jnp.float32, -k, k)
    b_fc = jax.random.uniform(k6, (n_classes,), jnp.float32, -k, k)
    params["fc_w_t"] = w_fc.T.astype(param_dtype)                  # (H, C) bf16
    params["fc_b"] = b_fc.reshape(1, n_classes)                    # (1, C) f32
    return params


def audio_dnn_forward(params, x_btd):
    """x_btd: (B, T, D) batch-first, like the PyTorch module.  Returns (B, n_classes)."""
    layers = params["lstm"]
    L = len(layers)
    B, T, D = x_btd.shape
    H = layers[0]["w_hh_t"].shape[0]
    C = params["fc_w_t"].shape[1]
    cd = layers[0]["w_ih_t"].dtype                                 # compute dtype (bf16)

    # --- (8, 128) padding: sublane-aligned batch, lane-aligned features/gates -------
    Bp = _round_up(B, 8)
    Dp = _round_up(D, 128)
    Hp = _round_up(H, 128)
    Cp = _round_up(C, 128)
    # >= 2 batch shards of >= 8 rows when possible, so the "parallel" batch grid
    # axis can be split across v7x's two TensorCores.
    Bb = Bp // 2 if Bp % 16 == 0 else Bp
    n_bshards = Bp // Bb

    chunk, vmem_limit = _plan(T, Bb, Dp, Hp, Cp, L)
    n_chunks = T // chunk

    # --- pad & lay out operands (production: pre-pad weights once, offline) ---------
    # Time-major, batch/feature padded, bf16 input: step k of a chunk is a contiguous,
    # sublane-aligned row block.
    x_p = jnp.transpose(
        jnp.pad(x_btd.astype(cd), ((0, Bp - B), (0, 0), (0, Dp - D))), (1, 0, 2))

    flat_weights = []
    weight_specs = []
    for li, lp in enumerate(layers):
        d_in_p = Dp if li == 0 else Hp
        flat_weights += [
            _pad_gate_matrix(lp["w_ih_t"], d_in_p, H, Hp),         # (d_in_p, 4Hp) bf16
            _pad_gate_matrix(lp["w_hh_t"], Hp, H, Hp),             # (Hp, 4Hp)     bf16
            _pad_gate_bias(lp["b"], H, Hp),                        # (1, 4Hp)      f32
        ]
        weight_specs += [
            pl.BlockSpec((d_in_p, 4 * Hp), lambda b, c: (0, 0)),
            pl.BlockSpec((Hp, 4 * Hp), lambda b, c: (0, 0)),
            pl.BlockSpec((1, 4 * Hp), lambda b, c: (0, 0)),
        ]
    wfc_p = jnp.pad(params["fc_w_t"], ((0, Hp - H), (0, Cp - C)))
    bfc_p = jnp.pad(params["fc_b"], ((0, 0), (0, Cp - C)))
    fc_specs = [pl.BlockSpec((Hp, Cp), lambda b, c: (0, 0)),
                pl.BlockSpec((1, Cp), lambda b, c: (0, 0))]

    scratch = [pltpu.VMEM((L, Bb, Hp), jnp.float32),               # h carries
               pltpu.VMEM((L, Bb, Hp), jnp.float32),               # c carries
               pltpu.VMEM((chunk, Bb, 4 * Hp), jnp.float32)]       # gx pre-activations
    if L > 1:
        scratch.append(pltpu.VMEM((chunk, Bb, Hp), cd))            # inter-layer seq

    kernel = _make_fused_kernel(L=L, Tc=chunk, Bb=Bb, Dp=Dp, Hp=Hp, Cp=Cp,
                                has_seq=(L > 1))

    out_p = pl.pallas_call(
        kernel,
        out_shape=jax.ShapeDtypeStruct((Bp, Cp), jnp.float32),
        grid_spec=pltpu.PrefetchScalarGridSpec(
            num_scalar_prefetch=0,
            grid=(n_bshards, n_chunks),
            in_specs=[pl.BlockSpec((chunk, Bb, Dp), lambda b, c: (c, b, 0))]
                     + weight_specs + fc_specs,
            out_specs=pl.BlockSpec((Bb, Cp), lambda b, c: (b, 0)),
            scratch_shapes=scratch,
        ),
        compiler_params=pltpu.CompilerParams(
            dimension_semantics=("parallel", "arbitrary"),   # batch || , time serial
            vmem_limit_bytes=vmem_limit),
    )(x_p, *flat_weights, wfc_p, bfc_p)

    return out_p[:B, :C]


# --------------------------- pure-JAX reference (same math) ------------------------

def _reference_forward(params, x_btd):
    cd = params["lstm"][0]["w_ih_t"].dtype
    seq = jnp.transpose(x_btd, (1, 0, 2)).astype(cd)               # (T, B, D)
    for lp in params["lstm"]:
        H = lp["w_hh_t"].shape[0]
        B = seq.shape[1]

        def step(carry, x_t, lp=lp, H=H):
            hh, cc = carry
            gates = (jnp.dot(x_t, lp["w_ih_t"], preferred_element_type=jnp.float32)
                     + jnp.dot(hh.astype(cd), lp["w_hh_t"],
                               preferred_element_type=jnp.float32)
                     + lp["b"])
            i = jax.nn.sigmoid(gates[:, 0 * H:1 * H])
            f = jax.nn.sigmoid(gates[:, 1 * H:2 * H])
            g = jnp.tanh(gates[:, 2 * H:3 * H])
            o = jax.nn.sigmoid(gates[:, 3 * H:4 * H])
            cc = f * cc + i * g
            hh = o * jnp.tanh(cc)
            return (hh, cc), hh

        init = (jnp.zeros((B, H), jnp.float32), jnp.zeros((B, H), jnp.float32))
        _, hs = jax.lax.scan(step, init, seq)
        seq = hs.astype(cd)                                        # bf16 inter-layer act
    return (jnp.dot(seq[-1], params["fc_w_t"], preferred_element_type=jnp.float32)
            + params["fc_b"])


if __name__ == "__main__":
    B, T, D, H, L, C = 2, 8, 16, 32, 2, 4
    key = jax.random.PRNGKey(0)
    key, kx = jax.random.split(key)
    x = jax.random.normal(kx, (B, T, D), jnp.float32)

    params = init_params(key, input_dim=D, hidden_dim=H, num_layers=L, n_classes=C)

    fwd = jax.jit(audio_dnn_forward)
    out = jax.block_until_ready(fwd(params, x))

    ref = jax.block_until_ready(_reference_forward(params, x))
    assert out.shape == (B, C), out.shape
    assert jnp.allclose(out, ref, atol=2e-3, rtol=2e-3), (out, ref)

    print("KERNEL_OK")
</pallas_src>

<mosaic_0001>
module attributes {stable_mosaic.version = 11 : i64} {
  func.func @kernel(%arg0: i32, %arg1: i32, %arg2: memref<8x8x128xbf16, #tpu.memory_space<vmem>>, %arg3: memref<128x512xbf16, #tpu.memory_space<vmem>>, %arg4: memref<128x512xbf16, #tpu.memory_space<vmem>>, %arg5: memref<1x512xf32, #tpu.memory_space<vmem>>, %arg6: memref<128x512xbf16, #tpu.memory_space<vmem>>, %arg7: memref<128x512xbf16, #tpu.memory_space<vmem>>, %arg8: memref<1x512xf32, #tpu.memory_space<vmem>>, %arg9: memref<128x128xbf16, #tpu.memory_space<vmem>>, %arg10: memref<1x128xf32, #tpu.memory_space<vmem>>, %arg11: memref<8x128xf32, #tpu.memory_space<vmem>>, %arg12: memref<2x8x128xf32, #tpu.memory_space<vmem>>, %arg13: memref<2x8x128xf32, #tpu.memory_space<vmem>>, %arg14: memref<8x8x512xf32, #tpu.memory_space<vmem>>, %arg15: memref<8x8x128xbf16, #tpu.memory_space<vmem>>) attributes {dimension_semantics = [#tpu.dimension_semantics<parallel>, #tpu.dimension_semantics<arbitrary>], iteration_bounds = array<i64: 1, 1>, scalar_prefetch = 0 : i64, scratch_operands = 4 : i64, tpu.core_type = #tpu.core_type<tc>, window_params = [{transform_indices = @transform_0, window_bounds = array<i64: 8, 8, 128>}, {pipeline_mode = #tpu.pipeline_mode<synchronous>, transform_indices = @transform_1, window_bounds = array<i64: 128, 512>}, {pipeline_mode = #tpu.pipeline_mode<synchronous>, transform_indices = @transform_2, window_bounds = array<i64: 128, 512>}, {pipeline_mode = #tpu.pipeline_mode<synchronous>, transform_indices = @transform_3, window_bounds = array<i64: 1, 512>}, {pipeline_mode = #tpu.pipeline_mode<synchronous>, transform_indices = @transform_4, window_bounds = array<i64: 128, 512>}, {pipeline_mode = #tpu.pipeline_mode<synchronous>, transform_indices = @transform_5, window_bounds = array<i64: 128, 512>}, {pipeline_mode = #tpu.pipeline_mode<synchronous>, transform_indices = @transform_6, window_bounds = array<i64: 1, 512>}, {pipeline_mode = #tpu.pipeline_mode<synchronous>, transform_indices = @transform_7, window_bounds = array<i64: 128, 128>}, {pipeline_mode = #tpu.pipeline_mode<synchronous>, transform_indices = @transform_8, window_bounds = array<i64: 1, 128>}, {transform_indices = @transform_9, window_bounds = array<i64: 8, 128>}]} {
    %c0_i32 = arith.constant 0 : i32
    %0 = arith.cmpi eq, %arg1, %c0_i32 : i32
    %1 = arith.extui %0 : i1 to i32
    %c0_i32_0 = arith.constant 0 : i32
    %2 = arith.cmpi ne, %1, %c0_i32_0 : i32
    scf.if %2 {
      %cst_56 = arith.constant 0.000000e+00 : f32
      %50 = vector.broadcast %cst_56 : f32 to vector<2x8x128xf32>
      %c0_57 = arith.constant 0 : index
      %c0_58 = arith.constant 0 : index
      %c0_59 = arith.constant 0 : index
      %51 = vector.load %arg12[%c0_57, %c0_58, %c0_59] : memref<2x8x128xf32, #tpu.memory_space<vmem>>, vector<2x8x128xf32>
      tpu.vector_store %arg12[%c0_57, %c0_58, %c0_59], %50 {strides = array<i32>} : memref<2x8x128xf32, #tpu.memory_space<vmem>>, vector<2x8x128xf32>,
      %cst_60 = arith.constant 0.000000e+00 : f32
      %52 = vector.broadcast %cst_60 : f32 to vector<2x8x128xf32>
      %c0_61 = arith.constant 0 : index
      %c0_62 = arith.constant 0 : index
      %c0_63 = arith.constant 0 : index
      %53 = vector.load %arg13[%c0_61, %c0_62, %c0_63] : memref<2x8x128xf32, #tpu.memory_space<vmem>>, vector<2x8x128xf32>
      tpu.vector_store %arg13[%c0_61, %c0_62, %c0_63], %52 {strides = array<i32>} : memref<2x8x128xf32, #tpu.memory_space<vmem>>, vector<2x8x128xf32>,
    } else {
    }
    %c0 = arith.constant 0 : index
    %c0_1 = arith.constant 0 : index
    %c0_2 = arith.constant 0 : index
    %3 = vector.load %arg2[%c0, %c0_1, %c0_2] : memref<8x8x128xbf16, #tpu.memory_space<vmem>>, vector<8x8x128xbf16>
    %4 = vector.shape_cast %3 : vector<8x8x128xbf16> to vector<64x128xbf16>
    %c0_3 = arith.constant 0 : index
    %c0_4 = arith.constant 0 : index
    %5 = vector.load %arg3[%c0_3, %c0_4] : memref<128x512xbf16, #tpu.memory_space<vmem>>, vector<128x512xbf16>
    %c0_5 = arith.constant 0 : index
    %c0_6 = arith.constant 0 : index
    %6 = vector.load %arg4[%c0_5, %c0_6] : memref<128x512xbf16, #tpu.memory_space<vmem>>, vector<128x512xbf16>
    %c0_7 = arith.constant 0 : index
    %c0_8 = arith.constant 0 : index
    %7 = vector.load %arg5[%c0_7, %c0_8] : memref<1x512xf32, #tpu.memory_space<vmem>>, vector<1x512xf32>
    %cst = arith.constant dense<0.000000e+00> : vector<64x512xf32>
    %8 = tpu.matmul %4, %5, %cst {dimension_numbers = #tpu.dot_dimension_numbers<[1], [0], [0], [1], [0, 0, 1, 1], [], []>} : vector<64x128xbf16>, vector<128x512xbf16>, vector<64x512xf32> -> vector<64x512xf32>
    %9 = vector.broadcast %7 : vector<1x512xf32> to vector<64x512xf32>
    %10 = arith.addf %8, %9 : vector<64x512xf32>
    %11 = vector.shape_cast %10 : vector<64x512xf32> to vector<8x8x512xf32>
    %c0_9 = arith.constant 0 : index
    %c0_10 = arith.constant 0 : index
    %c0_11 = arith.constant 0 : index
    %12 = vector.load %arg14[%c0_9, %c0_10, %c0_11] : memref<8x8x512xf32, #tpu.memory_space<vmem>>, vector<8x8x512xf32>
    tpu.vector_store %arg14[%c0_9, %c0_10, %c0_11], %11 {strides = array<i32>} : memref<8x8x512xf32, #tpu.memory_space<vmem>>, vector<8x8x512xf32>,
    %c0_12 = arith.constant 0 : index
    %c0_13 = arith.constant 0 : index
    %c0_14 = arith.constant 0 : index
    %13 = vector.load %arg12[%c0_12, %c0_13, %c0_14] : memref<2x8x128xf32, #tpu.memory_space<vmem>>, vector<1x8x128xf32>
    %14 = vector.shape_cast %13 : vector<1x8x128xf32> to vector<8x128xf32>
    %c0_15 = arith.constant 0 : index
    %c0_16 = arith.constant 0 : index
    %c0_17 = arith.constant 0 : index
    %15 = vector.load %arg13[%c0_15, %c0_16, %c0_17] : memref<2x8x128xf32, #tpu.memory_space<vmem>>, vector<1x8x128xf32>
    %16 = vector.shape_cast %15 : vector<1x8x128xf32> to vector<8x128xf32>
    %c0_i32_18 = arith.constant 0 : i32
    %c8_i32 = arith.constant 8 : i32
    %17 = arith.addi %c0_i32_18, %c8_i32 : i32
    %c1_i32 = arith.constant 1 : i32
    %18:2 = scf.for %arg16 = %c0_i32_18 to %17 step %c1_i32 iter_args(%arg17 = %14, %arg18 = %16) -> (vector<8x128xf32>, vector<8x128xf32>)  : i32 {
      %50 = arith.index_cast %arg16 : i32 to index
      %c0_56 = arith.constant 0 : index
      %c0_57 = arith.constant 0 : index
      %51 = vector.load %arg14[%50, %c0_56, %c0_57] : memref<8x8x512xf32, #tpu.memory_space<vmem>>, vector<1x8x512xf32>
      %52 = vector.shape_cast %51 : vector<1x8x512xf32> to vector<8x512xf32>
      %53 = arith.truncf %arg17 : vector<8x128xf32> to vector<8x128xbf16>
      %cst_58 = arith.constant dense<0.000000e+00> : vector<8x512xf32>
      %54 = tpu.matmul %53, %6, %cst_58 {dimension_numbers = #tpu.dot_dimension_numbers<[1], [0], [0], [1], [0, 0, 1, 1], [], []>} : vector<8x128xbf16>, vector<128x512xbf16>, vector<8x512xf32> -> vector<8x512xf32>
      %55 = arith.addf %52, %54 : vector<8x512xf32>
      %56 = vector.extract_strided_slice %55 {offsets = [0, 0], sizes = [8, 256], strides = [1, 1]} : vector<8x512xf32> to vector<8x256xf32>
      %57 = arith.negf %56 : vector<8x256xf32>
      %58 = math.exp %57 : vector<8x256xf32>
      %cst_59 = arith.constant 1.000000e+00 : f32
      %59 = vector.broadcast %cst_59 : f32 to vector<8x256xf32>
      %60 = arith.addf %59, %58 : vector<8x256xf32>
      %61 = arith.divf %59, %60 : vector<8x256xf32>
      %62 = vector.extract_strided_slice %55 {offsets = [0, 256], sizes = [8, 128], strides = [1, 1]} : vector<8x512xf32> to vector<8x128xf32>
      %63 = math.tanh %62 : vector<8x128xf32>
      %64 = vector.extract_strided_slice %55 {offsets = [0, 384], sizes = [8, 128], strides = [1, 1]} : vector<8x512xf32> to vector<8x128xf32>
      %65 = arith.negf %64 : vector<8x128xf32>
      %66 = math.exp %65 : vector<8x128xf32>
      %cst_60 = arith.constant 1.000000e+00 : f32
      %67 = vector.broadcast %cst_60 : f32 to vector<8x128xf32>
      %68 = arith.addf %67, %66 : vector<8x128xf32>
      %69 = arith.divf %67, %68 : vector<8x128xf32>
      %70 = vector.extract_strided_slice %61 {offsets = [0, 128], sizes = [8, 128], strides = [1, 1]} : vector<8x256xf32> to vector<8x128xf32>
      %71 = arith.mulf %70, %arg18 : vector<8x128xf32>
      %72 = vector.extract_strided_slice %61 {offsets = [0, 0], sizes = [8, 128], strides = [1, 1]} : vector<8x256xf32> to vector<8x128xf32>
      %73 = arith.mulf %72, %63 : vector<8x128xf32>
      %74 = arith.addf %71, %73 : vector<8x128xf32>
      %75 = math.tanh %74 : vector<8x128xf32>
      %76 = arith.mulf %69, %75 : vector<8x128xf32>
      %77 = arith.truncf %76 : vector<8x128xf32> to vector<8x128xbf16>
      %78 = arith.index_cast %arg16 : i32 to index
      %c0_61 = arith.constant 0 : index
      %c0_62 = arith.constant 0 : index
      %79 = vector.load %arg15[%78, %c0_61, %c0_62] : memref<8x8x128xbf16, #tpu.memory_space<vmem>>, vector<1x8x128xbf16>
      %80 = vector.shape_cast %79 : vector<1x8x128xbf16> to vector<8x128xbf16>
      %81 = vector.shape_cast %77 : vector<8x128xbf16> to vector<1x8x128xbf16>
      tpu.vector_store %arg15[%78, %c0_61, %c0_62], %81 {strides = array<i32>} : memref<8x8x128xbf16, #tpu.memory_space<vmem>>, vector<1x8x128xbf16>,
      scf.yield %76, %74 : vector<8x128xf32>, vector<8x128xf32>
    }
    %c8_i32_19 = arith.constant 8 : i32
    %c0_20 = arith.constant 0 : index
    %c0_21 = arith.constant 0 : index
    %c0_22 = arith.constant 0 : index
    %19 = vector.load %arg12[%c0_20, %c0_21, %c0_22] : memref<2x8x128xf32, #tpu.memory_space<vmem>>, vector<1x8x128xf32>
    %20 = vector.shape_cast %19 : vector<1x8x128xf32> to vector<8x128xf32>
    %21 = vector.shape_cast %18#0 : vector<8x128xf32> to vector<1x8x128xf32>
    tpu.vector_store %arg12[%c0_20, %c0_21, %c0_22], %21 {strides = array<i32>} : memref<2x8x128xf32, #tpu.memory_space<vmem>>, vector<1x8x128xf32>,
    %c0_23 = arith.constant 0 : index
    %c0_24 = arith.constant 0 : index
    %c0_25 = arith.constant 0 : index
    %22 = vector.load %arg13[%c0_23, %c0_24, %c0_25] : memref<2x8x128xf32, #tpu.memory_space<vmem>>, vector<1x8x128xf32>
    %23 = vector.shape_cast %22 : vector<1x8x128xf32> to vector<8x128xf32>
    %24 = vector.shape_cast %18#1 : vector<8x128xf32> to vector<1x8x128xf32>
    tpu.vector_store %arg13[%c0_23, %c0_24, %c0_25], %24 {strides = array<i32>} : memref<2x8x128xf32, #tpu.memory_space<vmem>>, vector<1x8x128xf32>,
    %c0_26 = arith.constant 0 : index
    %c0_27 = arith.constant 0 : index
    %c0_28 = arith.constant 0 : index
    %25 = vector.load %arg15[%c0_26, %c0_27, %c0_28] : memref<8x8x128xbf16, #tpu.memory_space<vmem>>, vector<8x8x128xbf16>
    %26 = vector.shape_cast %25 : vector<8x8x128xbf16> to vector<64x128xbf16>
    %c0_29 = arith.constant 0 : index
    %c0_30 = arith.constant 0 : index
    %27 = vector.load %arg6[%c0_29, %c0_30] : memref<128x512xbf16, #tpu.memory_space<vmem>>, vector<128x512xbf16>
    %c0_31 = arith.constant 0 : index
    %c0_32 = arith.constant 0 : index
    %28 = vector.load %arg7[%c0_31, %c0_32] : memref<128x512xbf16, #tpu.memory_space<vmem>>, vector<128x512xbf16>
    %c0_33 = arith.constant 0 : index
    %c0_34 = arith.constant 0 : index
    %29 = vector.load %arg8[%c0_33, %c0_34] : memref<1x512xf32, #tpu.memory_space<vmem>>, vector<1x512xf32>
    %cst_35 = arith.constant dense<0.000000e+00> : vector<64x512xf32>
    %30 = tpu.matmul %26, %27, %cst_35 {dimension_numbers = #tpu.dot_dimension_numbers<[1], [0], [0], [1], [0, 0, 1, 1], [], []>} : vector<64x128xbf16>, vector<128x512xbf16>, vector<64x512xf32> -> vector<64x512xf32>
    %31 = vector.broadcast %29 : vector<1x512xf32> to vector<64x512xf32>
    %32 = arith.addf %30, %31 : vector<64x512xf32>
    %33 = vector.shape_cast %32 : vector<64x512xf32> to vector<8x8x512xf32>
    %c0_36 = arith.constant 0 : index
    %c0_37 = arith.constant 0 : index
    %c0_38 = arith.constant 0 : index
    %34 = vector.load %arg14[%c0_36, %c0_37, %c0_38] : memref<8x8x512xf32, #tpu.memory_space<vmem>>, vector<8x8x512xf32>
    tpu.vector_store %arg14[%c0_36, %c0_37, %c0_38], %33 {strides = array<i32>} : memref<8x8x512xf32, #tpu.memory_space<vmem>>, vector<8x8x512xf32>,
    %c1 = arith.constant 1 : index
    %c0_39 = arith.constant 0 : index
    %c0_40 = arith.constant 0 : index
    %35 = vector.load %arg12[%c1, %c0_39, %c0_40] : memref<2x8x128xf32, #tpu.memory_space<vmem>>, vector<1x8x128xf32>
    %36 = vector.shape_cast %35 : vector<1x8x128xf32> to vector<8x128xf32>
    %c1_41 = arith.constant 1 : index
    %c0_42 = arith.constant 0 : index
    %c0_43 = arith.constant 0 : index
    %37 = vector.load %arg13[%c1_41, %c0_42, %c0_43] : memref<2x8x128xf32, #tpu.memory_space<vmem>>, vector<1x8x128xf32>
    %38 = vector.shape_cast %37 : vector<1x8x128xf32> to vector<8x128xf32>
    %c0_i32_44 = arith.constant 0 : i32
    %c8_i32_45 = arith.constant 8 : i32
    %39 = arith.addi %c0_i32_44, %c8_i32_45 : i32
    %c1_i32_46 = arith.constant 1 : i32
    %40:2 = scf.for %arg16 = %c0_i32_44 to %39 step %c1_i32_46 iter_args(%arg17 = %36, %arg18 = %38) -> (vector<8x128xf32>, vector<8x128xf32>)  : i32 {
      %50 = arith.index_cast %arg16 : i32 to index
      %c0_56 = arith.constant 0 : index
      %c0_57 = arith.constant 0 : index
      %51 = vector.load %arg14[%50, %c0_56, %c0_57] : memref<8x8x512xf32, #tpu.memory_space<vmem>>, vector<1x8x512xf32>
      %52 = vector.shape_cast %51 : vector<1x8x512xf32> to vector<8x512xf32>
      %53 = arith.truncf %arg17 : vector<8x128xf32> to vector<8x128xbf16>
      %cst_58 = arith.constant dense<0.000000e+00> : vector<8x512xf32>
      %54 = tpu.matmul %53, %28, %cst_58 {dimension_numbers = #tpu.dot_dimension_numbers<[1], [0], [0], [1], [0, 0, 1, 1], [], []>} : vector<8x128xbf16>, vector<128x512xbf16>, vector<8x512xf32> -> vector<8x512xf32>
      %55 = arith.addf %52, %54 : vector<8x512xf32>
      %56 = vector.extract_strided_slice %55 {offsets = [0, 0], sizes = [8, 256], strides = [1, 1]} : vector<8x512xf32> to vector<8x256xf32>
      %57 = arith.negf %56 : vector<8x256xf32>
      %58 = math.exp %57 : vector<8x256xf32>
      %cst_59 = arith.constant 1.000000e+00 : f32
      %59 = vector.broadcast %cst_59 : f32 to vector<8x256xf32>
      %60 = arith.addf %59, %58 : vector<8x256xf32>
      %61 = arith.divf %59, %60 : vector<8x256xf32>
      %62 = vector.extract_strided_slice %55 {offsets = [0, 256], sizes = [8, 128], strides = [1, 1]} : vector<8x512xf32> to vector<8x128xf32>
      %63 = math.tanh %62 : vector<8x128xf32>
      %64 = vector.extract_strided_slice %55 {offsets = [0, 384], sizes = [8, 128], strides = [1, 1]} : vector<8x512xf32> to vector<8x128xf32>
      %65 = arith.negf %64 : vector<8x128xf32>
      %66 = math.exp %65 : vector<8x128xf32>
      %cst_60 = arith.constant 1.000000e+00 : f32
      %67 = vector.broadcast %cst_60 : f32 to vector<8x128xf32>
      %68 = arith.addf %67, %66 : vector<8x128xf32>
      %69 = arith.divf %67, %68 : vector<8x128xf32>
      %70 = vector.extract_strided_slice %61 {offsets = [0, 128], sizes = [8, 128], strides = [1, 1]} : vector<8x256xf32> to vector<8x128xf32>
      %71 = arith.mulf %70, %arg18 : vector<8x128xf32>
      %72 = vector.extract_strided_slice %61 {offsets = [0, 0], sizes = [8, 128], strides = [1, 1]} : vector<8x256xf32> to vector<8x128xf32>
      %73 = arith.mulf %72, %63 : vector<8x128xf32>
      %74 = arith.addf %71, %73 : vector<8x128xf32>
      %75 = math.tanh %74 : vector<8x128xf32>
      %76 = arith.mulf %69, %75 : vector<8x128xf32>
      scf.yield %76, %74 : vector<8x128xf32>, vector<8x128xf32>
    }
    %c8_i32_47 = arith.constant 8 : i32
    %c1_48 = arith.constant 1 : index
    %c0_49 = arith.constant 0 : index
    %c0_50 = arith.constant 0 : index
    %41 = vector.load %arg12[%c1_48, %c0_49, %c0_50] : memref<2x8x128xf32, #tpu.memory_space<vmem>>, vector<1x8x128xf32>
    %42 = vector.shape_cast %41 : vector<1x8x128xf32> to vector<8x128xf32>
    %43 = vector.shape_cast %40#0 : vector<8x128xf32> to vector<1x8x128xf32>
    tpu.vector_store %arg12[%c1_48, %c0_49, %c0_50], %43 {strides = array<i32>} : memref<2x8x128xf32, #tpu.memory_space<vmem>>, vector<1x8x128xf32>,
    %c1_51 = arith.constant 1 : index
    %c0_52 = arith.constant 0 : index
    %c0_53 = arith.constant 0 : index
    %44 = vector.load %arg13[%c1_51, %c0_52, %c0_53] : memref<2x8x128xf32, #tpu.memory_space<vmem>>, vector<1x8x128xf32>
    %45 = vector.shape_cast %44 : vector<1x8x128xf32> to vector<8x128xf32>
    %46 = vector.shape_cast %40#1 : vector<8x128xf32> to vector<1x8x128xf32>
    tpu.vector_store %arg13[%c1_51, %c0_52, %c0_53], %46 {strides = array<i32>} : memref<2x8x128xf32, #tpu.memory_space<vmem>>, vector<1x8x128xf32>,
    %c0_i32_54 = arith.constant 0 : i32
    %47 = arith.cmpi eq, %arg1, %c0_i32_54 : i32
    %48 = arith.extui %47 : i1 to i32
    %c0_i32_55 = arith.constant 0 : i32
    %49 = arith.cmpi ne, %48, %c0_i32_55 : i32
    scf.if %49 {
      %50 = arith.truncf %40#0 : vector<8x128xf32> to vector<8x128xbf16>
      %c0_56 = arith.constant 0 : index
      %c0_57 = arith.constant 0 : index
      %51 = vector.load %arg9[%c0_56, %c0_57] : memref<128x128xbf16, #tpu.memory_space<vmem>>, vector<128x128xbf16>
      %cst_58 = arith.constant dense<0.000000e+00> : vector<8x128xf32>
      %52 = tpu.matmul %50, %51, %cst_58 {dimension_numbers = #tpu.dot_dimension_numbers<[1], [0], [0], [1], [0, 0, 1, 1], [], []>} : vector<8x128xbf16>, vector<128x128xbf16>, vector<8x128xf32> -> vector<8x128xf32>
      %c0_59 = arith.constant 0 : index
      %c0_60 = arith.constant 0 : index
      %53 = vector.load %arg10[%c0_59, %c0_60] : memref<1x128xf32, #tpu.memory_space<vmem>>, vector<1x128xf32>
      %54 = vector.broadcast %53 : vector<1x128xf32> to vector<8x128xf32>
      %55 = arith.addf %52, %54 : vector<8x128xf32>
      %c0_61 = arith.constant 0 : index
      %c0_62 = arith.constant 0 : index
      %56 = vector.load %arg11[%c0_61, %c0_62] : memref<8x128xf32, #tpu.memory_space<vmem>>, vector<8x128xf32>
      tpu.vector_store %arg11[%c0_61, %c0_62], %55 {strides = array<i32>} : memref<8x128xf32, #tpu.memory_space<vmem>>, vector<8x128xf32>,
    } else {
    }
    return
  }
  func.func @transform_0(%arg0: i32, %arg1: i32) -> (i32, i32, i32) {
    %c0_i32 = arith.constant 0 : i32
    %c0_i32_0 = arith.constant 0 : i32
    return %arg1, %arg0, %c0_i32 : i32, i32, i32
  }
  func.func @transform_1(%arg0: i32, %arg1: i32) -> (i32, i32) {
    %c0_i32 = arith.constant 0 : i32
    %c0_i32_0 = arith.constant 0 : i32
    %c0_i32_1 = arith.constant 0 : i32
    return %c0_i32, %c0_i32_0 : i32, i32
  }
  func.func @transform_2(%arg0: i32, %arg1: i32) -> (i32, i32) {
    %c0_i32 = arith.constant 0 : i32
    %c0_i32_0 = arith.constant 0 : i32
    %c0_i32_1 = arith.constant 0 : i32
    return %c0_i32, %c0_i32_0 : i32, i32
  }
  func.func @transform_3(%arg0: i32, %arg1: i32) -> (i32, i32) {
    %c0_i32 = arith.constant 0 : i32
    %c0_i32_0 = arith.constant 0 : i32
    %c0_i32_1 = arith.constant 0 : i32
    return %c0_i32, %c0_i32_0 : i32, i32
  }
  func.func @transform_4(%arg0: i32, %arg1: i32) -> (i32, i32) {
    %c0_i32 = arith.constant 0 : i32
    %c0_i32_0 = arith.constant 0 : i32
    %c0_i32_1 = arith.constant 0 : i32
    return %c0_i32, %c0_i32_0 : i32, i32
  }
  func.func @transform_5(%arg0: i32, %arg1: i32) -> (i32, i32) {
    %c0_i32 = arith.constant 0 : i32
    %c0_i32_0 = arith.constant 0 : i32
    %c0_i32_1 = arith.constant 0 : i32
    return %c0_i32, %c0_i32_0 : i32, i32
  }
  func.func @transform_6(%arg0: i32, %arg1: i32) -> (i32, i32) {
    %c0_i32 = arith.constant 0 : i32
    %c0_i32_0 = arith.constant 0 : i32
    %c0_i32_1 = arith.constant 0 : i32
    return %c0_i32, %c0_i32_0 : i32, i32
  }
  func.func @transform_7(%arg0: i32, %arg1: i32) -> (i32, i32) {
    %c0_i32 = arith.constant 0 : i32
    %c0_i32_0 = arith.constant 0 : i32
    %c0_i32_1 = arith.constant 0 : i32
    return %c0_i32, %c0_i32_0 : i32, i32
  }
  func.func @transform_8(%arg0: i32, %arg1: i32) -> (i32, i32) {
    %c0_i32 = arith.constant 0 : i32
    %c0_i32_0 = arith.constant 0 : i32
    %c0_i32_1 = arith.constant 0 : i32
    return %c0_i32, %c0_i32_0 : i32, i32
  }
  func.func @transform_9(%arg0: i32, %arg1: i32) -> (i32, i32) {
    %c0_i32 = arith.constant 0 : i32
    %c0_i32_0 = arith.constant 0 : i32
    return %arg0, %c0_i32 : i32, i32
  }
}

</mosaic_0001>

<llo_original>
// kernel: audio_dnn_forward.1
$region0: #{audio_dnn_forward.1}
  #allocation0 [shape = 'u32[]', space=smem, size = 0x4, offset = 0x4, fixed_abs, tag = 'smem constant byte address 0x4 - core index']
  #allocation1 [shape = 'u32[144,128]{1,0:T(1,128)}', space=vmem, size = 0x12000, scoped, tag = 'internal scratch']
  #allocation2 [shape = 'f32[2,8,128]{2,1,0:T(8,128)}', space=vmem, size = 0x2000, scoped, tag = 'scratch operand']
  #allocation3 [shape = 'f32[2,8,128]{2,1,0:T(8,128)}', space=vmem, size = 0x2000, scoped, tag = 'scratch operand']
  #allocation4 [shape = 'f32[8,8,512]{2,1,0:T(8,128)}', space=vmem, size = 0x20000, scoped, tag = 'scratch operand']
  #allocation5 [shape = 'bf16[8,8,128]{2,1,0:T(8,128)(2,1)}', space=vmem, size = 0x4000, scoped, tag = 'scratch operand']
  %s0 = inlined_call_operand.vmem [shape: bf16[8,8,128], index: 0, kind: input, shape index: {}]
  %s1 = inlined_call_operand.vmem [shape: bf16[128,512], index: 1, kind: input, shape index: {}]
  %s2 = inlined_call_operand.vmem [shape: bf16[128,512], index: 2, kind: input, shape index: {}]
  %s3 = inlined_call_operand.vmem [shape: f32[1,512], index: 3, kind: input, shape index: {}]
  %s4 = inlined_call_operand.vmem [shape: bf16[128,512], index: 4, kind: input, shape index: {}]
  %s5 = inlined_call_operand.vmem [shape: bf16[128,512], index: 5, kind: input, shape index: {}]
  %s6 = inlined_call_operand.vmem [shape: f32[1,512], index: 6, kind: input, shape index: {}]
  %s7 = inlined_call_operand.vmem [shape: bf16[128,128], index: 7, kind: input, shape index: {}]
  %s8 = inlined_call_operand.vmem [shape: f32[1,128], index: 8, kind: input, shape index: {}]
  %s9 = inlined_call_operand.vmem [shape: f32[8,128], index: 9, kind: output, shape index: {}]
  %s10 = sld [smem:[#allocation0]]
  $region68: #{audio_dnn_forward.1} parent=0
    _
  %s12 = ssub.s32 1, %s10
  %s13 = scalar_select 0, %s12, %s10
  // Predicated region
  $region2: #{audio_dnn_forward.1} parent=0 // pred_check
    _
  $region3: #{audio_dnn_forward.1} parent=0 // pred_check_branch
    %15 = sbr.rel (0) target = $region5
  $region4: #{audio_dnn_forward.1} parent=0 // pred_region
    _
  $region5: #{audio_dnn_forward.1} parent=0 // pred_fallthru
    _
  // Predicated region
  $region6: #{audio_dnn_forward.1} parent=0 // pred_check
    _
  $region7: #{audio_dnn_forward.1} parent=0 // pred_check_branch
    %17 = sbr.rel (0) target = $region9
  $region8: #{audio_dnn_forward.1} parent=0 // pred_region
    _
  $region9: #{audio_dnn_forward.1} parent=0 // pred_fallthru
    _
  // Predicated region
  $region10: #{audio_dnn_forward.1} parent=0 // pred_check
    _
  $region11: #{audio_dnn_forward.1} parent=0 // pred_check_branch
    %19 = sbr.rel (0) target = $region13
  $region12: #{audio_dnn_forward.1} parent=0 // pred_region
    _
  $region13: #{audio_dnn_forward.1} parent=0 // pred_fallthru
    _
  // Predicated region
  $region14: #{audio_dnn_forward.1} parent=0 // pred_check
    _
  $region15: #{audio_dnn_forward.1} parent=0 // pred_check_branch
    %21 = sbr.rel (0) target = $region17
  $region16: #{audio_dnn_forward.1} parent=0 // pred_region
    _
  $region17: #{audio_dnn_forward.1} parent=0 // pred_fallthru
    _
  // Predicated region
  $region18: #{audio_dnn_forward.1} parent=0 // pred_check
    _
  $region19: #{audio_dnn_forward.1} parent=0 // pred_check_branch
    %23 = sbr.rel (0) target = $region21
  $region20: #{audio_dnn_forward.1} parent=0 // pred_region
    _
  $region21: #{audio_dnn_forward.1} parent=0 // pred_fallthru
    _
  // Predicated region
  $region22: #{audio_dnn_forward.1} parent=0 // pred_check
    _
  $region23: #{audio_dnn_forward.1} parent=0 // pred_check_branch
    %25 = sbr.rel (0) target = $region25
  $region24: #{audio_dnn_forward.1} parent=0 // pred_region
    _
  $region25: #{audio_dnn_forward.1} parent=0 // pred_fallthru
    _
  // Predicated region
  $region26: #{audio_dnn_forward.1} parent=0 // pred_check
    _
  $region27: #{audio_dnn_forward.1} parent=0 // pred_check_branch
    %27 = sbr.rel (0) target = $region29
  $region28: #{audio_dnn_forward.1} parent=0 // pred_region
    _
  $region29: #{audio_dnn_forward.1} parent=0 // pred_fallthru
    _
  // Predicated region
  $region30: #{audio_dnn_forward.1} parent=0 // pred_check
    _
  $region31: #{audio_dnn_forward.1} parent=0 // pred_check_branch
    %29 = sbr.rel (0) target = $region33
  $region32: #{audio_dnn_forward.1} parent=0 // pred_region
    _
  $region33: #{audio_dnn_forward.1} parent=0 // pred_fallthru
    _
  // Predicated region
  $region34: #{audio_dnn_forward.1} parent=0 // pred_check
    _
  $region35: #{audio_dnn_forward.1} parent=0 // pred_check_branch
    %31 = sbr.rel (0) target = $region37
  $region36: #{audio_dnn_forward.1} parent=0 // pred_region
    _
  $region37: #{audio_dnn_forward.1} parent=0 // pred_fallthru
    _
  %p33 = scmp.eq.s32.totalorder 0, 0
  // Predicated region
  $region38: #{audio_dnn_forward.1} parent=0 // pred_check
    %p34 = pneg %p33
  $region39: #{audio_dnn_forward.1} parent=0 // pred_check_branch
    %36 = sbr.rel (%p34) target = $region41
  $region40: #{audio_dnn_forward.1} parent=0 // pred_region
    %37 = vst [vmem:[#allocation2] sm:$0xff] 0.0
    %38 = vst [vmem:[#allocation2 + $0x8] sm:$0xff] 0.0
    %39 = vst [vmem:[#allocation3] sm:$0xff] 0.0
    %40 = vst [vmem:[#allocation3 + $0x8] sm:$0xff] 0.0
  $region41: #{audio_dnn_forward.1} parent=0 // pred_fallthru
    _
  %v41 = vld [vmem:[%s0] sm:$0xf]
  %v42 = vld [vmem:[%s0 + $0x4] sm:$0xf]
  %v43 = vld [vmem:[%s0 + $0x8] sm:$0xf]
  %v44 = vld [vmem:[%s0 + $0xc] sm:$0xf]
  %v45 = vld [vmem:[%s0 + $0x10] sm:$0xf]
  %v46 = vld [vmem:[%s0 + $0x14] sm:$0xf]
  %v47 = vld [vmem:[%s0 + $0x18] sm:$0xf]
  %v48 = vld [vmem:[%s0 + $0x1c] sm:$0xf]
  %v49 = vld [vmem:[%s1] sm:$0xff]
  %v50 = vld [vmem:[%s1 + $0x8] sm:$0xff]
  %v51 = vld [vmem:[%s1 + $0x10] sm:$0xff]
  %v52 = vld [vmem:[%s1 + $0x18] sm:$0xff]
  %v53 = vld [vmem:[%s1 + $0x20] sm:$0xff]
  %v54 = vld [vmem:[%s1 + $0x28] sm:$0xff]
  %v55 = vld [vmem:[%s1 + $0x30] sm:$0xff]
  %v56 = vld [vmem:[%s1 + $0x38] sm:$0xff]
  %v57 = vld [vmem:[%s1 + $0x40] sm:$0xff]
  %v58 = vld [vmem:[%s1 + $0x48] sm:$0xff]
  %v59 = vld [vmem:[%s1 + $0x50] sm:$0xff]
  %v60 = vld [vmem:[%s1 + $0x58] sm:$0xff]
  %v61 = vld [vmem:[%s1 + $0x60] sm:$0xff]
  %v62 = vld [vmem:[%s1 + $0x68] sm:$0xff]
  %v63 = vld [vmem:[%s1 + $0x70] sm:$0xff]
  %v64 = vld [vmem:[%s1 + $0x78] sm:$0xff]
  %v65 = vld [vmem:[%s1 + $0x80] sm:$0xff]
  %v66 = vld [vmem:[%s1 + $0x88] sm:$0xff]
  %v67 = vld [vmem:[%s1 + $0x90] sm:$0xff]
  %v68 = vld [vmem:[%s1 + $0x98] sm:$0xff]
  %v69 = vld [vmem:[%s1 + $0xa0] sm:$0xff]
  %v70 = vld [vmem:[%s1 + $0xa8] sm:$0xff]
  %v71 = vld [vmem:[%s1 + $0xb0] sm:$0xff]
  %v72 = vld [vmem:[%s1 + $0xb8] sm:$0xff]
  %v73 = vld [vmem:[%s1 + $0xc0] sm:$0xff]
  %v74 = vld [vmem:[%s1 + $0xc8] sm:$0xff]
  %v75 = vld [vmem:[%s1 + $0xd0] sm:$0xff]
  %v76 = vld [vmem:[%s1 + $0xd8] sm:$0xff]
  %v77 = vld [vmem:[%s1 + $0xe0] sm:$0xff]
  %v78 = vld [vmem:[%s1 + $0xe8] sm:$0xff]
  %v79 = vld [vmem:[%s1 + $0xf0] sm:$0xff]
  %v80 = vld [vmem:[%s1 + $0xf8] sm:$0xff]
  %v81 = vld [vmem:[%s2] sm:$0xff]
  %v82 = vld [vmem:[%s2 + $0x8] sm:$0xff]
  %v83 = vld [vmem:[%s2 + $0x10] sm:$0xff]
  %v84 = vld [vmem:[%s2 + $0x18] sm:$0xff]
  %v85 = vld [vmem:[%s2 + $0x20] sm:$0xff]
  %v86 = vld [vmem:[%s2 + $0x28] sm:$0xff]
  %v87 = vld [vmem:[%s2 + $0x30] sm:$0xff]
  %v88 = vld [vmem:[%s2 + $0x38] sm:$0xff]
  %v89 = vld [vmem:[%s2 + $0x40] sm:$0xff]
  %v90 = vld [vmem:[%s2 + $0x48] sm:$0xff]
  %v91 = vld [vmem:[%s2 + $0x50] sm:$0xff]
  %v92 = vld [vmem:[%s2 + $0x58] sm:$0xff]
  %v93 = vld [vmem:[%s2 + $0x60] sm:$0xff]
  %v94 = vld [vmem:[%s2 + $0x68] sm:$0xff]
  %v95 = vld [vmem:[%s2 + $0x70] sm:$0xff]
  %v96 = vld [vmem:[%s2 + $0x78] sm:$0xff]
  %v97 = vld [vmem:[%s2 + $0x80] sm:$0xff]
  %v98 = vld [vmem:[%s2 + $0x88] sm:$0xff]
  %v99 = vld [vmem:[%s2 + $0x90] sm:$0xff]
  %v100 = vld [vmem:[%s2 + $0x98] sm:$0xff]
  %v101 = vld [vmem:[%s2 + $0xa0] sm:$0xff]
  %v102 = vld [vmem:[%s2 + $0xa8] sm:$0xff]
  %v103 = vld [vmem:[%s2 + $0xb0] sm:$0xff]
  %v104 = vld [vmem:[%s2 + $0xb8] sm:$0xff]
  %v105 = vld [vmem:[%s2 + $0xc0] sm:$0xff]
  %v106 = vld [vmem:[%s2 + $0xc8] sm:$0xff]
  %v107 = vld [vmem:[%s2 + $0xd0] sm:$0xff]
  %v108 = vld [vmem:[%s2 + $0xd8] sm:$0xff]
  %v109 = vld [vmem:[%s2 + $0xe0] sm:$0xff]
  %v110 = vld [vmem:[%s2 + $0xe8] sm:$0xff]
  %v111 = vld [vmem:[%s2 + $0xf0] sm:$0xff]
  %v112 = vld [vmem:[%s2 + $0xf8] sm:$0xff]
  %v113 = vld [vmem:[%s3] sm:$0xf]
  %v115 = vlaneseq
  %v116 = vshrl.u32 %v115, 7
  %v117 = vsub.s32 0, %v116
  %v118 = vrot.slane %v113, %v117
  %v119 = vlaneseq
  %v120 = vshrl.u32 %v119, 7
  %v121 = vsub.s32 1, %v120
  %v122 = vrot.slane %v113, %v121
  %v123 = vlaneseq
  %v124 = vshrl.u32 %v123, 7
  %v125 = vsub.s32 2, %v124
  %v126 = vrot.slane %v113, %v125
  %v127 = vlaneseq
  %v128 = vshrl.u32 %v127, 7
  %v129 = vsub.s32 3, %v128
  %v130 = vrot.slane %v113, %v129
  %v143 = vunpack.c.l.b16 %v41
  %v144 = vunpack.c.l.b16 %v42
  %v145 = vunpack.c.l.b16 %v43
  %v146 = vunpack.c.l.b16 %v44
  %v147 = vunpack.c.l.b16 %v45
  %v148 = vunpack.c.l.b16 %v46
  %v149 = vunpack.c.l.b16 %v47
  %v150 = vunpack.c.l.b16 %v48
  %v151 = vpack.c.b16 %v144, %v143
  %v152 = vpack.c.b16 %v146, %v145
  %v153 = vpack.c.b16 %v148, %v147
  %v154 = vpack.c.b16 %v150, %v149
  %v191 = vunpack.c.l.b16 %v49
  %v192 = vunpack.c.h.b16 %v49
  %v193 = vunpack.c.l.b16 %v50
  %v194 = vunpack.c.h.b16 %v50
  %v195 = vunpack.c.l.b16 %v51
  %v196 = vunpack.c.h.b16 %v51
  %v197 = vunpack.c.l.b16 %v52
  %v198 = vunpack.c.h.b16 %v52
  %v199 = vunpack.c.l.b16 %v53
  %v200 = vunpack.c.h.b16 %v53
  %v201 = vunpack.c.l.b16 %v54
  %v202 = vunpack.c.h.b16 %v54
  %v203 = vunpack.c.l.b16 %v55
  %v204 = vunpack.c.h.b16 %v55
  %v205 = vunpack.c.l.b16 %v56
  %v206 = vunpack.c.h.b16 %v56
  %v207 = vunpack.c.l.b16 %v57
  %v208 = vunpack.c.h.b16 %v57
  %v209 = vunpack.c.l.b16 %v58
  %v210 = vunpack.c.h.b16 %v58
  %v211 = vunpack.c.l.b16 %v59
  %v212 = vunpack.c.h.b16 %v59
  %v213 = vunpack.c.l.b16 %v60
  %v214 = vunpack.c.h.b16 %v60
  %v215 = vunpack.c.l.b16 %v61
  %v216 = vunpack.c.h.b16 %v61
  %v217 = vunpack.c.l.b16 %v62
  %v218 = vunpack.c.h.b16 %v62
  %v219 = vunpack.c.l.b16 %v63
  %v220 = vunpack.c.h.b16 %v63
  %v221 = vunpack.c.l.b16 %v64
  %v222 = vunpack.c.h.b16 %v64
  %v223 = vunpack.c.l.b16 %v65
  %v224 = vunpack.c.h.b16 %v65
  %v225 = vunpack.c.l.b16 %v66
  %v226 = vunpack.c.h.b16 %v66
  %v227 = vunpack.c.l.b16 %v67
  %v228 = vunpack.c.h.b16 %v67
  %v229 = vunpack.c.l.b16 %v68
  %v230 = vunpack.c.h.b16 %v68
  %v231 = vunpack.c.l.b16 %v69
  %v232 = vunpack.c.h.b16 %v69
  %v233 = vunpack.c.l.b16 %v70
  %v234 = vunpack.c.h.b16 %v70
  %v235 = vunpack.c.l.b16 %v71
  %v236 = vunpack.c.h.b16 %v71
  %v237 = vunpack.c.l.b16 %v72
  %v238 = vunpack.c.h.b16 %v72
  %v239 = vunpack.c.l.b16 %v73
  %v240 = vunpack.c.h.b16 %v73
  %v241 = vunpack.c.l.b16 %v74
  %v242 = vunpack.c.h.b16 %v74
  %v243 = vunpack.c.l.b16 %v75
  %v244 = vunpack.c.h.b16 %v75
  %v245 = vunpack.c.l.b16 %v76
  %v246 = vunpack.c.h.b16 %v76
  %v247 = vunpack.c.l.b16 %v77
  %v248 = vunpack.c.h.b16 %v77
  %v249 = vunpack.c.l.b16 %v78
  %v250 = vunpack.c.h.b16 %v78
  %v251 = vunpack.c.l.b16 %v79
  %v252 = vunpack.c.h.b16 %v79
  %v253 = vunpack.c.l.b16 %v80
  %v254 = vunpack.c.h.b16 %v80
  %v255 = vpack.c.b16 %v195, %v191
  %v256 = vpack.c.b16 %v196, %v192
  %v257 = vpack.c.b16 %v197, %v193
  %v258 = vpack.c.b16 %v198, %v194
  %v259 = vpack.c.b16 %v203, %v199
  %v260 = vpack.c.b16 %v204, %v200
  %v261 = vpack.c.b16 %v205, %v201
  %v262 = vpack.c.b16 %v206, %v202
  %v263 = vpack.c.b16 %v211, %v207
  %v264 = vpack.c.b16 %v212, %v208
  %v265 = vpack.c.b16 %v213, %v209
  %v266 = vpack.c.b16 %v214, %v210
  %v267 = vpack.c.b16 %v219, %v215
  %v268 = vpack.c.b16 %v220, %v216
  %v269 = vpack.c.b16 %v221, %v217
  %v270 = vpack.c.b16 %v222, %v218
  %v271 = vpack.c.b16 %v227, %v223
  %v272 = vpack.c.b16 %v228, %v224
  %v273 = vpack.c.b16 %v229, %v225
  %v274 = vpack.c.b16 %v230, %v226
  %v275 = vpack.c.b16 %v235, %v231
  %v276 = vpack.c.b16 %v236, %v232
  %v277 = vpack.c.b16 %v237, %v233
  %v278 = vpack.c.b16 %v238, %v234
  %v279 = vpack.c.b16 %v243, %v239
  %v280 = vpack.c.b16 %v244, %v240
  %v281 = vpack.c.b16 %v245, %v241
  %v282 = vpack.c.b16 %v246, %v242
  %v283 = vpack.c.b16 %v251, %v247
  %v284 = vpack.c.b16 %v252, %v248
  %v285 = vpack.c.b16 %v253, %v249
  %v286 = vpack.c.b16 %v254, %v250
  %319 = vmatprep.subr.bf16.mxu0 %v284
  %320 = vmatpush1.bf16.msra.mxu0 %v283
  %321 = vmatprep.subr.bf16.mxu0 %v280
  %322 = vmatpush1.bf16.msra.mxu0 %v279
  %323 = vmatprep.subr.bf16.mxu0 %v276
  %324 = vmatpush1.bf16.msra.mxu0 %v275
  %325 = vmatprep.subr.bf16.mxu0 %v272
  %326 = vmatpush1.bf16.msra.mxu0 %v271
  %327 = vmatprep.subr.bf16.mxu0 %v268
  %328 = vmatpush1.bf16.msra.mxu0 %v267
  %329 = vmatprep.subr.bf16.mxu0 %v264
  %330 = vmatpush1.bf16.msra.mxu0 %v263
  %331 = vmatprep.subr.bf16.mxu0 %v260
  %332 = vmatpush1.bf16.msra.mxu0 %v259
  %333 = vmatprep.subr.bf16.mxu0 %v256
  %334 = vmatpush1.bf16.msra.mxu0 %v255
  %335 = vmatprep.subr.bf16.mxu0 0
  %336 = vmatpush2.bf16.msra.mxu0 0
  %337 = vmatprep.subr.bf16.mxu0 0
  %338 = vmatpush2.bf16.msra.mxu0 0
  %339 = vmatprep.subr.bf16.mxu0 0
  %340 = vmatpush2.bf16.msra.mxu0 0
  %341 = vmatprep.subr.bf16.mxu0 0
  %342 = vmatpush2.bf16.msra.mxu0 0
  %343 = vmatprep.subr.bf16.mxu0 0
  %344 = vmatpush2.bf16.msra.mxu0 0
  %345 = vmatprep.subr.bf16.mxu0 0
  %346 = vmatpush2.bf16.msra.mxu0 0
  %347 = vmatprep.subr.bf16.mxu0 0
  %348 = vmatpush2.bf16.msra.mxu0 0
  %349 = vmatprep.subr.bf16.mxu0 0
  %350 = vmatpush2.bf16.msra.mxu0 0
  %351 = vmatprep.mubr.bf16.mxu0 0
  %352 = vmatmul.mubr.bf16.gmra.mxu0 %v151
  %v353 = vpop.f32.mrf.mxu0
  %v354 = vadd.f32 %v118, %v353
  %v355 = vpop.f32.mrf.mxu0
  %v356 = vadd.f32 %v122, %v355
  %v357 = vpop.f32.mrf.mxu0
  %v358 = vadd.f32 %v118, %v357
  %v359 = vpop.f32.mrf.mxu0
  %v360 = vadd.f32 %v122, %v359
  %361 = vmatprep.mubr.bf16.mxu0 0
  %362 = vmatmul.mubr.bf16.gmra.mxu0 %v152
  %v363 = vpop.f32.mrf.mxu0
  %v364 = vadd.f32 %v118, %v363
  %v365 = vpop.f32.mrf.mxu0
  %v366 = vadd.f32 %v122, %v365
  %v367 = vpop.f32.mrf.mxu0
  %v368 = vadd.f32 %v118, %v367
  %v369 = vpop.f32.mrf.mxu0
  %v370 = vadd.f32 %v122, %v369
  %371 = vmatprep.mubr.bf16.mxu0 0
  %372 = vmatmul.mubr.bf16.gmra.mxu0 %v153
  %v373 = vpop.f32.mrf.mxu0
  %v374 = vadd.f32 %v118, %v373
  %v375 = vpop.f32.mrf.mxu0
  %v376 = vadd.f32 %v122, %v375
  %v377 = vpop.f32.mrf.mxu0
  %v378 = vadd.f32 %v118, %v377
  %v379 = vpop.f32.mrf.mxu0
  %v380 = vadd.f32 %v122, %v379
  %381 = vmatprep.mubr.bf16.mxu0 0
  %382 = vmatmul.mubr.bf16.gmra.mxu0 %v154
  %v383 = vpop.f32.mrf.mxu0
  %v384 = vadd.f32 %v118, %v383
  %v385 = vpop.f32.mrf.mxu0
  %v386 = vadd.f32 %v122, %v385
  %v387 = vpop.f32.mrf.mxu0
  %v388 = vadd.f32 %v118, %v387
  %v389 = vpop.f32.mrf.mxu0
  %v390 = vadd.f32 %v122, %v389
  %391 = vdwg.mxu0
  %392 = vmatprep.subr.bf16.mxu0 %v286
  %393 = vmatpush1.bf16.msra.mxu0 %v285
  %394 = vmatprep.subr.bf16.mxu0 %v282
  %395 = vmatpush1.bf16.msra.mxu0 %v281
  %396 = vmatprep.subr.bf16.mxu0 %v278
  %397 = vmatpush1.bf16.msra.mxu0 %v277
  %398 = vmatprep.subr.bf16.mxu0 %v274
  %399 = vmatpush1.bf16.msra.mxu0 %v273
  %400 = vmatprep.subr.bf16.mxu0 %v270
  %401 = vmatpush1.bf16.msra.mxu0 %v269
  %402 = vmatprep.subr.bf16.mxu0 %v266
  %403 = vmatpush1.bf16.msra.mxu0 %v265
  %404 = vmatprep.subr.bf16.mxu0 %v262
  %405 = vmatpush1.bf16.msra.mxu0 %v261
  %406 = vmatprep.subr.bf16.mxu0 %v258
  %407 = vmatpush1.bf16.msra.mxu0 %v257
  %408 = vmatprep.subr.bf16.mxu0 0
  %409 = vmatpush2.bf16.msra.mxu0 0
  %410 = vmatprep.subr.bf16.mxu0 0
  %411 = vmatpush2.bf16.msra.mxu0 0
  %412 = vmatprep.subr.bf16.mxu0 0
  %413 = vmatpush2.bf16.msra.mxu0 0
  %414 = vmatprep.subr.bf16.mxu0 0
  %415 = vmatpush2.bf16.msra.mxu0 0
  %416 = vmatprep.subr.bf16.mxu0 0
  %417 = vmatpush2.bf16.msra.mxu0 0
  %418 = vmatprep.subr.bf16.mxu0 0
  %419 = vmatpush2.bf16.msra.mxu0 0
  %420 = vmatprep.subr.bf16.mxu0 0
  %421 = vmatpush2.bf16.msra.mxu0 0
  %422 = vmatprep.subr.bf16.mxu0 0
  %423 = vmatpush2.bf16.msra.mxu0 0
  %424 = vmatprep.mubr.bf16.mxu0 0
  %425 = vmatmul.mubr.bf16.gmra.mxu0 %v151
  %v426 = vpop.f32.mrf.mxu0
  %v427 = vadd.f32 %v126, %v426
  %v428 = vpop.f32.mrf.mxu0
  %v429 = vadd.f32 %v130, %v428
  %v430 = vpop.f32.mrf.mxu0
  %v431 = vadd.f32 %v126, %v430
  %v432 = vpop.f32.mrf.mxu0
  %v433 = vadd.f32 %v130, %v432
  %434 = vmatprep.mubr.bf16.mxu0 0
  %435 = vmatmul.mubr.bf16.gmra.mxu0 %v152
  %v436 = vpop.f32.mrf.mxu0
  %v437 = vadd.f32 %v126, %v436
  %v438 = vpop.f32.mrf.mxu0
  %v439 = vadd.f32 %v130, %v438
  %v440 = vpop.f32.mrf.mxu0
  %v441 = vadd.f32 %v126, %v440
  %v442 = vpop.f32.mrf.mxu0
  %v443 = vadd.f32 %v130, %v442
  %444 = vmatprep.mubr.bf16.mxu0 0
  %445 = vmatmul.mubr.bf16.gmra.mxu0 %v153
  %v446 = vpop.f32.mrf.mxu0
  %v447 = vadd.f32 %v126, %v446
  %v448 = vpop.f32.mrf.mxu0
  %v449 = vadd.f32 %v130, %v448
  %v450 = vpop.f32.mrf.mxu0
  %v451 = vadd.f32 %v126, %v450
  %v452 = vpop.f32.mrf.mxu0
  %v453 = vadd.f32 %v130, %v452
  %454 = vmatprep.mubr.bf16.mxu0 0
  %455 = vmatmul.mubr.bf16.gmra.mxu0 %v154
  %v456 = vpop.f32.mrf.mxu0
  %v457 = vadd.f32 %v126, %v456
  %v458 = vpop.f32.mrf.mxu0
  %v459 = vadd.f32 %v130, %v458
  %v460 = vpop.f32.mrf.mxu0
  %v461 = vadd.f32 %v126, %v460
  %v462 = vpop.f32.mrf.mxu0
  %v463 = vadd.f32 %v130, %v462
  %464 = vdwg.mxu0
  %465 = vst [vmem:[#allocation4] sm:$0xff] %v354
  %466 = vst [vmem:[#allocation4 + $0x8] sm:$0xff] %v356
  %467 = vst [vmem:[#allocation4 + $0x10] sm:$0xff] %v427
  %468 = vst [vmem:[#allocation4 + $0x18] sm:$0xff] %v429
  %469 = vst [vmem:[#allocation4 + $0x20] sm:$0xff] %v358
  %470 = vst [vmem:[#allocation4 + $0x28] sm:$0xff] %v360
  %471 = vst [vmem:[#allocation4 + $0x30] sm:$0xff] %v431
  %472 = vst [vmem:[#allocation4 + $0x38] sm:$0xff] %v433
  %473 = vst [vmem:[#allocation4 + $0x40] sm:$0xff] %v364
  %474 = vst [vmem:[#allocation4 + $0x48] sm:$0xff] %v366
  %475 = vst [vmem:[#allocation4 + $0x50] sm:$0xff] %v437
  %476 = vst [vmem:[#allocation4 + $0x58] sm:$0xff] %v439
  %477 = vst [vmem:[#allocation4 + $0x60] sm:$0xff] %v368
  %478 = vst [vmem:[#allocation4 + $0x68] sm:$0xff] %v370
  %479 = vst [vmem:[#allocation4 + $0x70] sm:$0xff] %v441
  %480 = vst [vmem:[#allocation4 + $0x78] sm:$0xff] %v443
  %481 = vst [vmem:[#allocation4 + $0x80] sm:$0xff] %v374
  %482 = vst [vmem:[#allocation4 + $0x88] sm:$0xff] %v376
  %483 = vst [vmem:[#allocation4 + $0x90] sm:$0xff] %v447
  %484 = vst [vmem:[#allocation4 + $0x98] sm:$0xff] %v449
  %485 = vst [vmem:[#allocation4 + $0xa0] sm:$0xff] %v378
  %486 = vst [vmem:[#allocation4 + $0xa8] sm:$0xff] %v380
  %487 = vst [vmem:[#allocation4 + $0xb0] sm:$0xff] %v451
  %488 = vst [vmem:[#allocation4 + $0xb8] sm:$0xff] %v453
  %489 = vst [vmem:[#allocation4 + $0xc0] sm:$0xff] %v384
  %490 = vst [vmem:[#allocation4 + $0xc8] sm:$0xff] %v386
  %491 = vst [vmem:[#allocation4 + $0xd0] sm:$0xff] %v457
  %492 = vst [vmem:[#allocation4 + $0xd8] sm:$0xff] %v459
  %493 = vst [vmem:[#allocation4 + $0xe0] sm:$0xff] %v388
  %494 = vst [vmem:[#allocation4 + $0xe8] sm:$0xff] %v390
  %495 = vst [vmem:[#allocation4 + $0xf0] sm:$0xff] %v461
  %496 = vst [vmem:[#allocation4 + $0xf8] sm:$0xff] %v463
  %v497 = vld [vmem:[#allocation2] sm:$0xff]
  %v498 = vld [vmem:[#allocation3] sm:$0xff]
  loop: start=0, step=1, limit=8
  $region42: #{audio_dnn_forward.1} parent=0 // loop_pre_header
    _
  $region43: #{audio_dnn_forward.1} parent=0 // loop_header
    %s500 = sphi 0, %s504
    %p501 = scmp.ge.s32.totalorder %s500, 8
    %v505 = vphi %v497, %v784
    %v506 = vphi %v498, %v782
  $region44: #{audio_dnn_forward.1} parent=0 // loop_header_branch
    %503 = sbr.rel (%p501) target = $region48
  $region45: #{audio_dnn_forward.1} parent=0 // loop_body
    %s507 = smul.u32 %s500, 4
    %s508 = smul.addr %s507, 8
    %s509 = scalar_lea.vmem [#allocation4], %s508
    %v510 = vld [vmem:[%s509] sm:$0xff]
    %v511 = vld [vmem:[%s509 + $0x8] sm:$0xff]
    %v512 = vld [vmem:[%s509 + $0x10] sm:$0xff]
    %v513 = vld [vmem:[%s509 + $0x18] sm:$0xff]
    %v514 = vpack.c.bf16 %v505, %v505
    %v547 = vunpack.c.l.b16 %v81
    %v548 = vunpack.c.h.b16 %v81
    %v549 = vunpack.c.l.b16 %v82
    %v550 = vunpack.c.h.b16 %v82
    %v551 = vunpack.c.l.b16 %v83
    %v552 = vunpack.c.h.b16 %v83
    %v553 = vunpack.c.l.b16 %v84
    %v554 = vunpack.c.h.b16 %v84
    %v555 = vunpack.c.l.b16 %v85
    %v556 = vunpack.c.h.b16 %v85
    %v557 = vunpack.c.l.b16 %v86
    %v558 = vunpack.c.h.b16 %v86
    %v559 = vunpack.c.l.b16 %v87
    %v560 = vunpack.c.h.b16 %v87
    %v561 = vunpack.c.l.b16 %v88
    %v562 = vunpack.c.h.b16 %v88
    %v563 = vunpack.c.l.b16 %v89
    %v564 = vunpack.c.h.b16 %v89
    %v565 = vunpack.c.l.b16 %v90
    %v566 = vunpack.c.h.b16 %v90
    %v567 = vunpack.c.l.b16 %v91
    %v568 = vunpack.c.h.b16 %v91
    %v569 = vunpack.c.l.b16 %v92
    %v570 = vunpack.c.h.b16 %v92
    %v571 = vunpack.c.l.b16 %v93
    %v572 = vunpack.c.h.b16 %v93
    %v573 = vunpack.c.l.b16 %v94
    %v574 = vunpack.c.h.b16 %v94
    %v575 = vunpack.c.l.b16 %v95
    %v576 = vunpack.c.h.b16 %v95
    %v577 = vunpack.c.l.b16 %v96
    %v578 = vunpack.c.h.b16 %v96
    %v579 = vunpack.c.l.b16 %v97
    %v580 = vunpack.c.h.b16 %v97
    %v581 = vunpack.c.l.b16 %v98
    %v582 = vunpack.c.h.b16 %v98
    %v583 = vunpack.c.l.b16 %v99
    %v584 = vunpack.c.h.b16 %v99
    %v585 = vunpack.c.l.b16 %v100
    %v586 = vunpack.c.h.b16 %v100
    %v587 = vunpack.c.l.b16 %v101
    %v588 = vunpack.c.h.b16 %v101
    %v589 = vunpack.c.l.b16 %v102
    %v590 = vunpack.c.h.b16 %v102
    %v591 = vunpack.c.l.b16 %v103
    %v592 = vunpack.c.h.b16 %v103
    %v593 = vunpack.c.l.b16 %v104
    %v594 = vunpack.c.h.b16 %v104
    %v595 = vunpack.c.l.b16 %v105
    %v596 = vunpack.c.h.b16 %v105
    %v597 = vunpack.c.l.b16 %v106
    %v598 = vunpack.c.h.b16 %v106
    %v599 = vunpack.c.l.b16 %v107
    %v600 = vunpack.c.h.b16 %v107
    %v601 = vunpack.c.l.b16 %v108
    %v602 = vunpack.c.h.b16 %v108
    %v603 = vunpack.c.l.b16 %v109
    %v604 = vunpack.c.h.b16 %v109
    %v605 = vunpack.c.l.b16 %v110
    %v606 = vunpack.c.h.b16 %v110
    %v607 = vunpack.c.l.b16 %v111
    %v608 = vunpack.c.h.b16 %v111
    %v609 = vunpack.c.l.b16 %v112
    %v610 = vunpack.c.h.b16 %v112
    %v611 = vpack.c.b16 %v551, %v547
    %v612 = vpack.c.b16 %v552, %v548
    %v613 = vpack.c.b16 %v553, %v549
    %v614 = vpack.c.b16 %v554, %v550
    %v615 = vpack.c.b16 %v559, %v555
    %v616 = vpack.c.b16 %v560, %v556
    %v617 = vpack.c.b16 %v561, %v557
    %v618 = vpack.c.b16 %v562, %v558
    %v619 = vpack.c.b16 %v567, %v563
    %v620 = vpack.c.b16 %v568, %v564
    %v621 = vpack.c.b16 %v569, %v565
    %v622 = vpack.c.b16 %v570, %v566
    %v623 = vpack.c.b16 %v575, %v571
    %v624 = vpack.c.b16 %v576, %v572
    %v625 = vpack.c.b16 %v577, %v573
    %v626 = vpack.c.b16 %v578, %v574
    %v627 = vpack.c.b16 %v583, %v579
    %v628 = vpack.c.b16 %v584, %v580
    %v629 = vpack.c.b16 %v585, %v581
    %v630 = vpack.c.b16 %v586, %v582
    %v631 = vpack.c.b16 %v591, %v587
    %v632 = vpack.c.b16 %v592, %v588
    %v633 = vpack.c.b16 %v593, %v589
    %v634 = vpack.c.b16 %v594, %v590
    %v635 = vpack.c.b16 %v599, %v595
    %v636 = vpack.c.b16 %v600, %v596
    %v637 = vpack.c.b16 %v601, %v597
    %v638 = vpack.c.b16 %v602, %v598
    %v639 = vpack.c.b16 %v607, %v603
    %v640 = vpack.c.b16 %v608, %v604
    %v641 = vpack.c.b16 %v609, %v605
    %v642 = vpack.c.b16 %v610, %v606
    %675 = vmatprep.subr.bf16.mxu0 %v640
    %676 = vmatpush1.bf16.msra.mxu0 %v639
    %677 = vmatprep.subr.bf16.mxu0 %v636
    %678 = vmatpush1.bf16.msra.mxu0 %v635
    %679 = vmatprep.subr.bf16.mxu0 %v632
    %680 = vmatpush1.bf16.msra.mxu0 %v631
    %681 = vmatprep.subr.bf16.mxu0 %v628
    %682 = vmatpush1.bf16.msra.mxu0 %v627
    %683 = vmatprep.subr.bf16.mxu0 %v624
    %684 = vmatpush1.bf16.msra.mxu0 %v623
    %685 = vmatprep.subr.bf16.mxu0 %v620
    %686 = vmatpush1.bf16.msra.mxu0 %v619
    %687 = vmatprep.subr.bf16.mxu0 %v616
    %688 = vmatpush1.bf16.msra.mxu0 %v615
    %689 = vmatprep.subr.bf16.mxu0 %v612
    %690 = vmatpush1.bf16.msra.mxu0 %v611
    %691 = vmatprep.subr.bf16.mxu0 0
    %692 = vmatpush2.bf16.msra.mxu0 0
    %693 = vmatprep.subr.bf16.mxu0 0
    %694 = vmatpush2.bf16.msra.mxu0 0
    %695 = vmatprep.subr.bf16.mxu0 0
    %696 = vmatpush2.bf16.msra.mxu0 0
    %697 = vmatprep.subr.bf16.mxu0 0
    %698 = vmatpush2.bf16.msra.mxu0 0
    %699 = vmatprep.subr.bf16.mxu0 0
    %700 = vmatpush2.bf16.msra.mxu0 0
    %701 = vmatprep.subr.bf16.mxu0 0
    %702 = vmatpush2.bf16.msra.mxu0 0
    %703 = vmatprep.subr.bf16.mxu0 0
    %704 = vmatpush2.bf16.msra.mxu0 0
    %705 = vmatprep.subr.bf16.mxu0 0
    %706 = vmatpush2.bf16.msra.mxu0 0
    %707 = vmatprep.mubr.bf16.mxu0 0
    %708 = vmatmul.mubr.bf16.gmra.mxu0 %v514
    %v709 = vpop.f32.mrf.mxu0
    %v710 = vadd.f32 0.0, %v709
    %v711 = vpop.f32.mrf.mxu0
    %v712 = vadd.f32 0.0, %v711
    %v713 = vpop.f32.mrf.mxu0
    %v714 = vpop.f32.mrf.mxu0
    %715 = vdwg.mxu0
    %716 = vmatprep.subr.bf16.mxu0 %v642
    %717 = vmatpush1.bf16.msra.mxu0 %v641
    %718 = vmatprep.subr.bf16.mxu0 %v638
    %719 = vmatpush1.bf16.msra.mxu0 %v637
    %720 = vmatprep.subr.bf16.mxu0 %v634
    %721 = vmatpush1.bf16.msra.mxu0 %v633
    %722 = vmatprep.subr.bf16.mxu0 %v630
    %723 = vmatpush1.bf16.msra.mxu0 %v629
    %724 = vmatprep.subr.bf16.mxu0 %v626
    %725 = vmatpush1.bf16.msra.mxu0 %v625
    %726 = vmatprep.subr.bf16.mxu0 %v622
    %727 = vmatpush1.bf16.msra.mxu0 %v621
    %728 = vmatprep.subr.bf16.mxu0 %v618
    %729 = vmatpush1.bf16.msra.mxu0 %v617
    %730 = vmatprep.subr.bf16.mxu0 %v614
    %731 = vmatpush1.bf16.msra.mxu0 %v613
    %732 = vmatprep.subr.bf16.mxu0 0
    %733 = vmatpush2.bf16.msra.mxu0 0
    %734 = vmatprep.subr.bf16.mxu0 0
    %735 = vmatpush2.bf16.msra.mxu0 0
    %736 = vmatprep.subr.bf16.mxu0 0
    %737 = vmatpush2.bf16.msra.mxu0 0
    %738 = vmatprep.subr.bf16.mxu0 0
    %739 = vmatpush2.bf16.msra.mxu0 0
    %740 = vmatprep.subr.bf16.mxu0 0
    %741 = vmatpush2.bf16.msra.mxu0 0
    %742 = vmatprep.subr.bf16.mxu0 0
    %743 = vmatpush2.bf16.msra.mxu0 0
    %744 = vmatprep.subr.bf16.mxu0 0
    %745 = vmatpush2.bf16.msra.mxu0 0
    %746 = vmatprep.subr.bf16.mxu0 0
    %747 = vmatpush2.bf16.msra.mxu0 0
    %748 = vmatprep.mubr.bf16.mxu0 0
    %749 = vmatmul.mubr.bf16.gmra.mxu0 %v514
    %v750 = vpop.f32.mrf.mxu0
    %v751 = vadd.f32 0.0, %v750
    %v752 = vpop.f32.mrf.mxu0
    %v753 = vadd.f32 0.0, %v752
    %v754 = vpop.f32.mrf.mxu0
    %v755 = vpop.f32.mrf.mxu0
    %756 = vdwg.mxu0
    %v757 = vadd.f32 %v510, %v710
    %v758 = vadd.f32 %v511, %v712
    %v759 = vadd.f32 %v512, %v751
    %v760 = vadd.f32 %v513, %v753
    %v761 = vxor.u32 %v757, 2147483648
    %v762 = vxor.u32 %v758, 2147483648
    %v763 = vmul.f32 %v761, 1.442695
    %v764 = vpow.pop %v763
    %v765 = vmul.f32 %v762, 1.442695
    %v766 = vpow.pop %v765
    %v767 = vadd.f32 %v764, 1.0
    %v768 = vadd.f32 %v766, 1.0
    %v769 = vrcp.pop %v767
    %v770 = vmul.f32 1.0, %v769
    %v771 = vrcp.pop %v768
    %v772 = vmul.f32 1.0, %v771
    %v773 = vtanh.pop %v759
    %v774 = vxor.u32 %v760, 2147483648
    %v775 = vmul.f32 %v774, 1.442695
    %v776 = vpow.pop %v775
    %v777 = vadd.f32 %v776, 1.0
    %v778 = vrcp.pop %v777
    %v779 = vmul.f32 1.0, %v778
    %v780 = vmul.f32 %v772, %v506
    %v781 = vmul.f32 %v770, %v773
    %v782 = vadd.f32 %v780, %v781
    %v783 = vtanh.pop %v782
    %v784 = vmul.f32 %v779, %v783
    %v785 = vpack.c.bf16 %v784, %v784
    %s786 = smul.addr %s500, 4
    %s787 = scalar_lea.vmem [#allocation5], %s786
    %788 = vst [vmem:[%s787] sm:$0xf] %v785
  $region46: #{audio_dnn_forward.1} parent=0 // loop_footer
    %s504 = sadd.s32 1, %s500
  $region47: #{audio_dnn_forward.1} parent=0 // loop_footer_branch
    %499 = sbr.rel target = $region43
  $region48: #{audio_dnn_forward.1} parent=0 // loop_exit
    _
  %789 = vst [vmem:[#allocation2] sm:$0xff] %v505
  %790 = vst [vmem:[#allocation3] sm:$0xff] %v506
  %v791 = vld [vmem:[#allocation5] sm:$0xf]
  %v792 = vld [vmem:[#allocation5 + $0x4] sm:$0xf]
  %v793 = vld [vmem:[#allocation5 + $0x8] sm:$0xf]
  %v794 = vld [vmem:[#allocation5 + $0xc] sm:$0xf]
  %v795 = vld [vmem:[#allocation5 + $0x10] sm:$0xf]
  %v796 = vld [vmem:[#allocation5 + $0x14] sm:$0xf]
  %v797 = vld [vmem:[#allocation5 + $0x18] sm:$0xf]
  %v798 = vld [vmem:[#allocation5 + $0x1c] sm:$0xf]
  %v799 = vld [vmem:[%s4] sm:$0xff]
  %v800 = vld [vmem:[%s4 + $0x8] sm:$0xff]
  %v801 = vld [vmem:[%s4 + $0x10] sm:$0xff]
  %v802 = vld [vmem:[%s4 + $0x18] sm:$0xff]
  %v803 = vld [vmem:[%s4 + $0x20] sm:$0xff]
  %v804 = vld [vmem:[%s4 + $0x28] sm:$0xff]
  %v805 = vld [vmem:[%s4 + $0x30] sm:$0xff]
  %v806 = vld [vmem:[%s4 + $0x38] sm:$0xff]
  %v807 = vld [vmem:[%s4 + $0x40] sm:$0xff]
  %v808 = vld [vmem:[%s4 + $0x48] sm:$0xff]
  %v809 = vld [vmem:[%s4 + $0x50] sm:$0xff]
  %v810 = vld [vmem:[%s4 + $0x58] sm:$0xff]
  %v811 = vld [vmem:[%s4 + $0x60] sm:$0xff]
  %v812 = vld [vmem:[%s4 + $0x68] sm:$0xff]
  %v813 = vld [vmem:[%s4 + $0x70] sm:$0xff]
  %v814 = vld [vmem:[%s4 + $0x78] sm:$0xff]
  %v815 = vld [vmem:[%s4 + $0x80] sm:$0xff]
  %v816 = vld [vmem:[%s4 + $0x88] sm:$0xff]
  %v817 = vld [vmem:[%s4 + $0x90] sm:$0xff]
  %v818 = vld [vmem:[%s4 + $0x98] sm:$0xff]
  %v819 = vld [vmem:[%s4 + $0xa0] sm:$0xff]
  %v820 = vld [vmem:[%s4 + $0xa8] sm:$0xff]
  %v821 = vld [vmem:[%s4 + $0xb0] sm:$0xff]
  %v822 = vld [vmem:[%s4 + $0xb8] sm:$0xff]
  %v823 = vld [vmem:[%s4 + $0xc0] sm:$0xff]
  %v824 = vld [vmem:[%s4 + $0xc8] sm:$0xff]
  %v825 = vld [vmem:[%s4 + $0xd0] sm:$0xff]
  %v826 = vld [vmem:[%s4 + $0xd8] sm:$0xff]
  %v827 = vld [vmem:[%s4 + $0xe0] sm:$0xff]
  %v828 = vld [vmem:[%s4 + $0xe8] sm:$0xff]
  %v829 = vld [vmem:[%s4 + $0xf0] sm:$0xff]
  %v830 = vld [vmem:[%s4 + $0xf8] sm:$0xff]
  %v831 = vld [vmem:[%s5] sm:$0xff]
  %v832 = vld [vmem:[%s5 + $0x8] sm:$0xff]
  %v833 = vld [vmem:[%s5 + $0x10] sm:$0xff]
  %v834 = vld [vmem:[%s5 + $0x18] sm:$0xff]
  %v835 = vld [vmem:[%s5 + $0x20] sm:$0xff]
  %v836 = vld [vmem:[%s5 + $0x28] sm:$0xff]
  %v837 = vld [vmem:[%s5 + $0x30] sm:$0xff]
  %v838 = vld [vmem:[%s5 + $0x38] sm:$0xff]
  %v839 = vld [vmem:[%s5 + $0x40] sm:$0xff]
  %v840 = vld [vmem:[%s5 + $0x48] sm:$0xff]
  %v841 = vld [vmem:[%s5 + $0x50] sm:$0xff]
  %v842 = vld [vmem:[%s5 + $0x58] sm:$0xff]
  %v843 = vld [vmem:[%s5 + $0x60] sm:$0xff]
  %v844 = vld [vmem:[%s5 + $0x68] sm:$0xff]
  %v845 = vld [vmem:[%s5 + $0x70] sm:$0xff]
  %v846 = vld [vmem:[%s5 + $0x78] sm:$0xff]
  %v847 = vld [vmem:[%s5 + $0x80] sm:$0xff]
  %v848 = vld [vmem:[%s5 + $0x88] sm:$0xff]
  %v849 = vld [vmem:[%s5 + $0x90] sm:$0xff]
  %v850 = vld [vmem:[%s5 + $0x98] sm:$0xff]
  %v851 = vld [vmem:[%s5 + $0xa0] sm:$0xff]
  %v852 = vld [vmem:[%s5 + $0xa8] sm:$0xff]
  %v853 = vld [vmem:[%s5 + $0xb0] sm:$0xff]
  %v854 = vld [vmem:[%s5 + $0xb8] sm:$0xff]
  %v855 = vld [vmem:[%s5 + $0xc0] sm:$0xff]
  %v856 = vld [vmem:[%s5 + $0xc8] sm:$0xff]
  %v857 = vld [vmem:[%s5 + $0xd0] sm:$0xff]
  %v858 = vld [vmem:[%s5 + $0xd8] sm:$0xff]
  %v859 = vld [vmem:[%s5 + $0xe0] sm:$0xff]
  %v860 = vld [vmem:[%s5 + $0xe8] sm:$0xff]
  %v861 = vld [vmem:[%s5 + $0xf0] sm:$0xff]
  %v862 = vld [vmem:[%s5 + $0xf8] sm:$0xff]
  %v863 = vld [vmem:[%s6] sm:$0xf]
  %v865 = vlaneseq
  %v866 = vshrl.u32 %v865, 7
  %v867 = vsub.s32 0, %v866
  %v868 = vrot.slane %v863, %v867
  %v869 = vlaneseq
  %v870 = vshrl.u32 %v869, 7
  %v871 = vsub.s32 1, %v870
  %v872 = vrot.slane %v863, %v871
  %v873 = vlaneseq
  %v874 = vshrl.u32 %v873, 7
  %v875 = vsub.s32 2, %v874
  %v876 = vrot.slane %v863, %v875
  %v877 = vlaneseq
  %v878 = vshrl.u32 %v877, 7
  %v879 = vsub.s32 3, %v878
  %v880 = vrot.slane %v863, %v879
  %v893 = vunpack.c.l.b16 %v791
  %v894 = vunpack.c.l.b16 %v792
  %v895 = vunpack.c.l.b16 %v793
  %v896 = vunpack.c.l.b16 %v794
  %v897 = vunpack.c.l.b16 %v795
  %v898 = vunpack.c.l.b16 %v796
  %v899 = vunpack.c.l.b16 %v797
  %v900 = vunpack.c.l.b16 %v798
  %v901 = vpack.c.b16 %v894, %v893
  %v902 = vpack.c.b16 %v896, %v895
  %v903 = vpack.c.b16 %v898, %v897
  %v904 = vpack.c.b16 %v900, %v899
  %v941 = vunpack.c.l.b16 %v799
  %v942 = vunpack.c.h.b16 %v799
  %v943 = vunpack.c.l.b16 %v800
  %v944 = vunpack.c.h.b16 %v800
  %v945 = vunpack.c.l.b16 %v801
  %v946 = vunpack.c.h.b16 %v801
  %v947 = vunpack.c.l.b16 %v802
  %v948 = vunpack.c.h.b16 %v802
  %v949 = vunpack.c.l.b16 %v803
  %v950 = vunpack.c.h.b16 %v803
  %v951 = vunpack.c.l.b16 %v804
  %v952 = vunpack.c.h.b16 %v804
  %v953 = vunpack.c.l.b16 %v805
  %v954 = vunpack.c.h.b16 %v805
  %v955 = vunpack.c.l.b16 %v806
  %v956 = vunpack.c.h.b16 %v806
  %v957 = vunpack.c.l.b16 %v807
  %v958 = vunpack.c.h.b16 %v807
  %v959 = vunpack.c.l.b16 %v808
  %v960 = vunpack.c.h.b16 %v808
  %v961 = vunpack.c.l.b16 %v809
  %v962 = vunpack.c.h.b16 %v809
  %v963 = vunpack.c.l.b16 %v810
  %v964 = vunpack.c.h.b16 %v810
  %v965 = vunpack.c.l.b16 %v811
  %v966 = vunpack.c.h.b16 %v811
  %v967 = vunpack.c.l.b16 %v812
  %v968 = vunpack.c.h.b16 %v812
  %v969 = vunpack.c.l.b16 %v813
  %v970 = vunpack.c.h.b16 %v813
  %v971 = vunpack.c.l.b16 %v814
  %v972 = vunpack.c.h.b16 %v814
  %v973 = vunpack.c.l.b16 %v815
  %v974 = vunpack.c.h.b16 %v815
  %v975 = vunpack.c.l.b16 %v816
  %v976 = vunpack.c.h.b16 %v816
  %v977 = vunpack.c.l.b16 %v817
  %v978 = vunpack.c.h.b16 %v817
  %v979 = vunpack.c.l.b16 %v818
  %v980 = vunpack.c.h.b16 %v818
  %v981 = vunpack.c.l.b16 %v819
  %v982 = vunpack.c.h.b16 %v819
  %v983 = vunpack.c.l.b16 %v820
  %v984 = vunpack.c.h.b16 %v820
  %v985 = vunpack.c.l.b16 %v821
  %v986 = vunpack.c.h.b16 %v821
  %v987 = vunpack.c.l.b16 %v822
  %v988 = vunpack.c.h.b16 %v822
  %v989 = vunpack.c.l.b16 %v823
  %v990 = vunpack.c.h.b16 %v823
  %v991 = vunpack.c.l.b16 %v824
  %v992 = vunpack.c.h.b16 %v824
  %v993 = vunpack.c.l.b16 %v825
  %v994 = vunpack.c.h.b16 %v825
  %v995 = vunpack.c.l.b16 %v826
  %v996 = vunpack.c.h.b16 %v826
  %v997 = vunpack.c.l.b16 %v827
  %v998 = vunpack.c.h.b16 %v827
  %v999 = vunpack.c.l.b16 %v828
  %v1000 = vunpack.c.h.b16 %v828
  %v1001 = vunpack.c.l.b16 %v829
  %v1002 = vunpack.c.h.b16 %v829
  %v1003 = vunpack.c.l.b16 %v830
  %v1004 = vunpack.c.h.b16 %v830
  %v1005 = vpack.c.b16 %v945, %v941
  %v1006 = vpack.c.b16 %v946, %v942
  %v1007 = vpack.c.b16 %v947, %v943
  %v1008 = vpack.c.b16 %v948, %v944
  %v1009 = vpack.c.b16 %v953, %v949
  %v1010 = vpack.c.b16 %v954, %v950
  %v1011 = vpack.c.b16 %v955, %v951
  %v1012 = vpack.c.b16 %v956, %v952
  %v1013 = vpack.c.b16 %v961, %v957
  %v1014 = vpack.c.b16 %v962, %v958
  %v1015 = vpack.c.b16 %v963, %v959
  %v1016 = vpack.c.b16 %v964, %v960
  %v1017 = vpack.c.b16 %v969, %v965
  %v1018 = vpack.c.b16 %v970, %v966
  %v1019 = vpack.c.b16 %v971, %v967
  %v1020 = vpack.c.b16 %v972, %v968
  %v1021 = vpack.c.b16 %v977, %v973
  %v1022 = vpack.c.b16 %v978, %v974
  %v1023 = vpack.c.b16 %v979, %v975
  %v1024 = vpack.c.b16 %v980, %v976
  %v1025 = vpack.c.b16 %v985, %v981
  %v1026 = vpack.c.b16 %v986, %v982
  %v1027 = vpack.c.b16 %v987, %v983
  %v1028 = vpack.c.b16 %v988, %v984
  %v1029 = vpack.c.b16 %v993, %v989
  %v1030 = vpack.c.b16 %v994, %v990
  %v1031 = vpack.c.b16 %v995, %v991
  %v1032 = vpack.c.b16 %v996, %v992
  %v1033 = vpack.c.b16 %v1001, %v997
  %v1034 = vpack.c.b16 %v1002, %v998
  %v1035 = vpack.c.b16 %v1003, %v999
  %v1036 = vpack.c.b16 %v1004, %v1000
  %1069 = vmatprep.subr.bf16.mxu0 %v1034
  %1070 = vmatpush1.bf16.msra.mxu0 %v1033
  %1071 = vmatprep.subr.bf16.mxu0 %v1030
  %1072 = vmatpush1.bf16.msra.mxu0 %v1029
  %1073 = vmatprep.subr.bf16.mxu0 %v1026
  %1074 = vmatpush1.bf16.msra.mxu0 %v1025
  %1075 = vmatprep.subr.bf16.mxu0 %v1022
  %1076 = vmatpush1.bf16.msra.mxu0 %v1021
  %1077 = vmatprep.subr.bf16.mxu0 %v1018
  %1078 = vmatpush1.bf16.msra.mxu0 %v1017
  %1079 = vmatprep.subr.bf16.mxu0 %v1014
  %1080 = vmatpush1.bf16.msra.mxu0 %v1013
  %1081 = vmatprep.subr.bf16.mxu0 %v1010
  %1082 = vmatpush1.bf16.msra.mxu0 %v1009
  %1083 = vmatprep.subr.bf16.mxu0 %v1006
  %1084 = vmatpush1.bf16.msra.mxu0 %v1005
  %1085 = vmatprep.subr.bf16.mxu0 0
  %1086 = vmatpush2.bf16.msra.mxu0 0
  %1087 = vmatprep.subr.bf16.mxu0 0
  %1088 = vmatpush2.bf16.msra.mxu0 0
  %1089 = vmatprep.subr.bf16.mxu0 0
  %1090 = vmatpush2.bf16.msra.mxu0 0
  %1091 = vmatprep.subr.bf16.mxu0 0
  %1092 = vmatpush2.bf16.msra.mxu0 0
  %1093 = vmatprep.subr.bf16.mxu0 0
  %1094 = vmatpush2.bf16.msra.mxu0 0
  %1095 = vmatprep.subr.bf16.mxu0 0
  %1096 = vmatpush2.bf16.msra.mxu0 0
  %1097 = vmatprep.subr.bf16.mxu0 0
  %1098 = vmatpush2.bf16.msra.mxu0 0
  %1099 = vmatprep.subr.bf16.mxu0 0
  %1100 = vmatpush2.bf16.msra.mxu0 0
  %1101 = vmatprep.mubr.bf16.mxu0 0
  %1102 = vmatmul.mubr.bf16.gmra.mxu0 %v901
  %v1103 = vpop.f32.mrf.mxu0
  %v1104 = vadd.f32 %v868, %v1103
  %v1105 = vpop.f32.mrf.mxu0
  %v1106 = vadd.f32 %v872, %v1105
  %v1107 = vpop.f32.mrf.mxu0
  %v1108 = vadd.f32 %v868, %v1107
  %v1109 = vpop.f32.mrf.mxu0
  %v1110 = vadd.f32 %v872, %v1109
  %1111 = vmatprep.mubr.bf16.mxu0 0
  %1112 = vmatmul.mubr.bf16.gmra.mxu0 %v902
  %v1113 = vpop.f32.mrf.mxu0
  %v1114 = vadd.f32 %v868, %v1113
  %v1115 = vpop.f32.mrf.mxu0
  %v1116 = vadd.f32 %v872, %v1115
  %v1117 = vpop.f32.mrf.mxu0
  %v1118 = vadd.f32 %v868, %v1117
  %v1119 = vpop.f32.mrf.mxu0
  %v1120 = vadd.f32 %v872, %v1119
  %1121 = vmatprep.mubr.bf16.mxu0 0
  %1122 = vmatmul.mubr.bf16.gmra.mxu0 %v903
  %v1123 = vpop.f32.mrf.mxu0
  %v1124 = vadd.f32 %v868, %v1123
  %v1125 = vpop.f32.mrf.mxu0
  %v1126 = vadd.f32 %v872, %v1125
  %v1127 = vpop.f32.mrf.mxu0
  %v1128 = vadd.f32 %v868, %v1127
  %v1129 = vpop.f32.mrf.mxu0
  %v1130 = vadd.f32 %v872, %v1129
  %1131 = vmatprep.mubr.bf16.mxu0 0
  %1132 = vmatmul.mubr.bf16.gmra.mxu0 %v904
  %v1133 = vpop.f32.mrf.mxu0
  %v1134 = vadd.f32 %v868, %v1133
  %v1135 = vpop.f32.mrf.mxu0
  %v1136 = vadd.f32 %v872, %v1135
  %v1137 = vpop.f32.mrf.mxu0
  %v1138 = vadd.f32 %v868, %v1137
  %v1139 = vpop.f32.mrf.mxu0
  %v1140 = vadd.f32 %v872, %v1139
  %1141 = vdwg.mxu0
  %1142 = vmatprep.subr.bf16.mxu0 %v1036
  %1143 = vmatpush1.bf16.msra.mxu0 %v1035
  %1144 = vmatprep.subr.bf16.mxu0 %v1032
  %1145 = vmatpush1.bf16.msra.mxu0 %v1031
  %1146 = vmatprep.subr.bf16.mxu0 %v1028
  %1147 = vmatpush1.bf16.msra.mxu0 %v1027
  %1148 = vmatprep.subr.bf16.mxu0 %v1024
  %1149 = vmatpush1.bf16.msra.mxu0 %v1023
  %1150 = vmatprep.subr.bf16.mxu0 %v1020
  %1151 = vmatpush1.bf16.msra.mxu0 %v1019
  %1152 = vmatprep.subr.bf16.mxu0 %v1016
  %1153 = vmatpush1.bf16.msra.mxu0 %v1015
  %1154 = vmatprep.subr.bf16.mxu0 %v1012
  %1155 = vmatpush1.bf16.msra.mxu0 %v1011
  %1156 = vmatprep.subr.bf16.mxu0 %v1008
  %1157 = vmatpush1.bf16.msra.mxu0 %v1007
  %1158 = vmatprep.subr.bf16.mxu0 0
  %1159 = vmatpush2.bf16.msra.mxu0 0
  %1160 = vmatprep.subr.bf16.mxu0 0
  %1161 = vmatpush2.bf16.msra.mxu0 0
  %1162 = vmatprep.subr.bf16.mxu0 0
  %1163 = vmatpush2.bf16.msra.mxu0 0
  %1164 = vmatprep.subr.bf16.mxu0 0
  %1165 = vmatpush2.bf16.msra.mxu0 0
  %1166 = vmatprep.subr.bf16.mxu0 0
  %1167 = vmatpush2.bf16.msra.mxu0 0
  %1168 = vmatprep.subr.bf16.mxu0 0
  %1169 = vmatpush2.bf16.msra.mxu0 0
  %1170 = vmatprep.subr.bf16.mxu0 0
  %1171 = vmatpush2.bf16.msra.mxu0 0
  %1172 = vmatprep.subr.bf16.mxu0 0
  %1173 = vmatpush2.bf16.msra.mxu0 0
  %1174 = vmatprep.mubr.bf16.mxu0 0
  %1175 = vmatmul.mubr.bf16.gmra.mxu0 %v901
  %v1176 = vpop.f32.mrf.mxu0
  %v1177 = vadd.f32 %v876, %v1176
  %v1178 = vpop.f32.mrf.mxu0
  %v1179 = vadd.f32 %v880, %v1178
  %v1180 = vpop.f32.mrf.mxu0
  %v1181 = vadd.f32 %v876, %v1180
  %v1182 = vpop.f32.mrf.mxu0
  %v1183 = vadd.f32 %v880, %v1182
  %1184 = vmatprep.mubr.bf16.mxu0 0
  %1185 = vmatmul.mubr.bf16.gmra.mxu0 %v902
  %v1186 = vpop.f32.mrf.mxu0
  %v1187 = vadd.f32 %v876, %v1186
  %v1188 = vpop.f32.mrf.mxu0
  %v1189 = vadd.f32 %v880, %v1188
  %v1190 = vpop.f32.mrf.mxu0
  %v1191 = vadd.f32 %v876, %v1190
  %v1192 = vpop.f32.mrf.mxu0
  %v1193 = vadd.f32 %v880, %v1192
  %1194 = vmatprep.mubr.bf16.mxu0 0
  %1195 = vmatmul.mubr.bf16.gmra.mxu0 %v903
  %v1196 = vpop.f32.mrf.mxu0
  %v1197 = vadd.f32 %v876, %v1196
  %v1198 = vpop.f32.mrf.mxu0
  %v1199 = vadd.f32 %v880, %v1198
  %v1200 = vpop.f32.mrf.mxu0
  %v1201 = vadd.f32 %v876, %v1200
  %v1202 = vpop.f32.mrf.mxu0
  %v1203 = vadd.f32 %v880, %v1202
  %1204 = vmatprep.mubr.bf16.mxu0 0
  %1205 = vmatmul.mubr.bf16.gmra.mxu0 %v904
  %v1206 = vpop.f32.mrf.mxu0
  %v1207 = vadd.f32 %v876, %v1206
  %v1208 = vpop.f32.mrf.mxu0
  %v1209 = vadd.f32 %v880, %v1208
  %v1210 = vpop.f32.mrf.mxu0
  %v1211 = vadd.f32 %v876, %v1210
  %v1212 = vpop.f32.mrf.mxu0
  %v1213 = vadd.f32 %v880, %v1212
  %1214 = vdwg.mxu0
  %1215 = vst [vmem:[#allocation4] sm:$0xff] %v1104
  %1216 = vst [vmem:[#allocation4 + $0x8] sm:$0xff] %v1106
  %1217 = vst [vmem:[#allocation4 + $0x10] sm:$0xff] %v1177
  %1218 = vst [vmem:[#allocation4 + $0x18] sm:$0xff] %v1179
  %1219 = vst [vmem:[#allocation4 + $0x20] sm:$0xff] %v1108
  %1220 = vst [vmem:[#allocation4 + $0x28] sm:$0xff] %v1110
  %1221 = vst [vmem:[#allocation4 + $0x30] sm:$0xff] %v1181
  %1222 = vst [vmem:[#allocation4 + $0x38] sm:$0xff] %v1183
  %1223 = vst [vmem:[#allocation4 + $0x40] sm:$0xff] %v1114
  %1224 = vst [vmem:[#allocation4 + $0x48] sm:$0xff] %v1116
  %1225 = vst [vmem:[#allocation4 + $0x50] sm:$0xff] %v1187
  %1226 = vst [vmem:[#allocation4 + $0x58] sm:$0xff] %v1189
  %1227 = vst [vmem:[#allocation4 + $0x60] sm:$0xff] %v1118
  %1228 = vst [vmem:[#allocation4 + $0x68] sm:$0xff] %v1120
  %1229 = vst [vmem:[#allocation4 + $0x70] sm:$0xff] %v1191
  %1230 = vst [vmem:[#allocation4 + $0x78] sm:$0xff] %v1193
  %1231 = vst [vmem:[#allocation4 + $0x80] sm:$0xff] %v1124
  %1232 = vst [vmem:[#allocation4 + $0x88] sm:$0xff] %v1126
  %1233 = vst [vmem:[#allocation4 + $0x90] sm:$0xff] %v1197
  %1234 = vst [vmem:[#allocation4 + $0x98] sm:$0xff] %v1199
  %1235 = vst [vmem:[#allocation4 + $0xa0] sm:$0xff] %v1128
  %1236 = vst [vmem:[#allocation4 + $0xa8] sm:$0xff] %v1130
  %1237 = vst [vmem:[#allocation4 + $0xb0] sm:$0xff] %v1201
  %1238 = vst [vmem:[#allocation4 + $0xb8] sm:$0xff] %v1203
  %1239 = vst [vmem:[#allocation4 + $0xc0] sm:$0xff] %v1134
  %1240 = vst [vmem:[#allocation4 + $0xc8] sm:$0xff] %v1136
  %1241 = vst [vmem:[#allocation4 + $0xd0] sm:$0xff] %v1207
  %1242 = vst [vmem:[#allocation4 + $0xd8] sm:$0xff] %v1209
  %1243 = vst [vmem:[#allocation4 + $0xe0] sm:$0xff] %v1138
  %1244 = vst [vmem:[#allocation4 + $0xe8] sm:$0xff] %v1140
  %1245 = vst [vmem:[#allocation4 + $0xf0] sm:$0xff] %v1211
  %1246 = vst [vmem:[#allocation4 + $0xf8] sm:$0xff] %v1213
  %s1247 = scalar_lea.vmem [#allocation2], 8
  %v1248 = vld [vmem:[%s1247] sm:$0xff]
  %s1249 = scalar_lea.vmem [#allocation3], 8
  %v1250 = vld [vmem:[%s1249] sm:$0xff]
  loop: start=0, step=1, limit=8
  $region49: #{audio_dnn_forward.1} parent=0 // loop_pre_header
    _
  $region50: #{audio_dnn_forward.1} parent=0 // loop_header
    %s1252 = sphi 0, %s1256
    %p1253 = scmp.ge.s32.totalorder %s1252, 8
    %v1257 = vphi %v1248, %v1536
    %v1258 = vphi %v1250, %v1534
  $region51: #{audio_dnn_forward.1} parent=0 // loop_header_branch
    %1255 = sbr.rel (%p1253) target = $region55
  $region52: #{audio_dnn_forward.1} parent=0 // loop_body
    %s1259 = smul.u32 %s1252, 4
    %s1260 = smul.addr %s1259, 8
    %s1261 = scalar_lea.vmem [#allocation4], %s1260
    %v1262 = vld [vmem:[%s1261] sm:$0xff]
    %v1263 = vld [vmem:[%s1261 + $0x8] sm:$0xff]
    %v1264 = vld [vmem:[%s1261 + $0x10] sm:$0xff]
    %v1265 = vld [vmem:[%s1261 + $0x18] sm:$0xff]
    %v1266 = vpack.c.bf16 %v1257, %v1257
    %v1299 = vunpack.c.l.b16 %v831
    %v1300 = vunpack.c.h.b16 %v831
    %v1301 = vunpack.c.l.b16 %v832
    %v1302 = vunpack.c.h.b16 %v832
    %v1303 = vunpack.c.l.b16 %v833
    %v1304 = vunpack.c.h.b16 %v833
    %v1305 = vunpack.c.l.b16 %v834
    %v1306 = vunpack.c.h.b16 %v834
    %v1307 = vunpack.c.l.b16 %v835
    %v1308 = vunpack.c.h.b16 %v835
    %v1309 = vunpack.c.l.b16 %v836
    %v1310 = vunpack.c.h.b16 %v836
    %v1311 = vunpack.c.l.b16 %v837
    %v1312 = vunpack.c.h.b16 %v837
    %v1313 = vunpack.c.l.b16 %v838
    %v1314 = vunpack.c.h.b16 %v838
    %v1315 = vunpack.c.l.b16 %v839
    %v1316 = vunpack.c.h.b16 %v839
    %v1317 = vunpack.c.l.b16 %v840
    %v1318 = vunpack.c.h.b16 %v840
    %v1319 = vunpack.c.l.b16 %v841
    %v1320 = vunpack.c.h.b16 %v841
    %v1321 = vunpack.c.l.b16 %v842
    %v1322 = vunpack.c.h.b16 %v842
    %v1323 = vunpack.c.l.b16 %v843
    %v1324 = vunpack.c.h.b16 %v843
    %v1325 = vunpack.c.l.b16 %v844
    %v1326 = vunpack.c.h.b16 %v844
    %v1327 = vunpack.c.l.b16 %v845
    %v1328 = vunpack.c.h.b16 %v845
    %v1329 = vunpack.c.l.b16 %v846
    %v1330 = vunpack.c.h.b16 %v846
    %v1331 = vunpack.c.l.b16 %v847
    %v1332 = vunpack.c.h.b16 %v847
    %v1333 = vunpack.c.l.b16 %v848
    %v1334 = vunpack.c.h.b16 %v848
    %v1335 = vunpack.c.l.b16 %v849
    %v1336 = vunpack.c.h.b16 %v849
    %v1337 = vunpack.c.l.b16 %v850
    %v1338 = vunpack.c.h.b16 %v850
    %v1339 = vunpack.c.l.b16 %v851
    %v1340 = vunpack.c.h.b16 %v851
    %v1341 = vunpack.c.l.b16 %v852
    %v1342 = vunpack.c.h.b16 %v852
    %v1343 = vunpack.c.l.b16 %v853
    %v1344 = vunpack.c.h.b16 %v853
    %v1345 = vunpack.c.l.b16 %v854
    %v1346 = vunpack.c.h.b16 %v854
    %v1347 = vunpack.c.l.b16 %v855
    %v1348 = vunpack.c.h.b16 %v855
    %v1349 = vunpack.c.l.b16 %v856
    %v1350 = vunpack.c.h.b16 %v856
    %v1351 = vunpack.c.l.b16 %v857
    %v1352 = vunpack.c.h.b16 %v857
    %v1353 = vunpack.c.l.b16 %v858
    %v1354 = vunpack.c.h.b16 %v858
    %v1355 = vunpack.c.l.b16 %v859
    %v1356 = vunpack.c.h.b16 %v859
    %v1357 = vunpack.c.l.b16 %v860
    %v1358 = vunpack.c.h.b16 %v860
    %v1359 = vunpack.c.l.b16 %v861
    %v1360 = vunpack.c.h.b16 %v861
    %v1361 = vunpack.c.l.b16 %v862
    %v1362 = vunpack.c.h.b16 %v862
    %v1363 = vpack.c.b16 %v1303, %v1299
    %v1364 = vpack.c.b16 %v1304, %v1300
    %v1365 = vpack.c.b16 %v1305, %v1301
    %v1366 = vpack.c.b16 %v1306, %v1302
    %v1367 = vpack.c.b16 %v1311, %v1307
    %v1368 = vpack.c.b16 %v1312, %v1308
    %v1369 = vpack.c.b16 %v1313, %v1309
    %v1370 = vpack.c.b16 %v1314, %v1310
    %v1371 = vpack.c.b16 %v1319, %v1315
    %v1372 = vpack.c.b16 %v1320, %v1316
    %v1373 = vpack.c.b16 %v1321, %v1317
    %v1374 = vpack.c.b16 %v1322, %v1318
    %v1375 = vpack.c.b16 %v1327, %v1323
    %v1376 = vpack.c.b16 %v1328, %v1324
    %v1377 = vpack.c.b16 %v1329, %v1325
    %v1378 = vpack.c.b16 %v1330, %v1326
    %v1379 = vpack.c.b16 %v1335, %v1331
    %v1380 = vpack.c.b16 %v1336, %v1332
    %v1381 = vpack.c.b16 %v1337, %v1333
    %v1382 = vpack.c.b16 %v1338, %v1334
    %v1383 = vpack.c.b16 %v1343, %v1339
    %v1384 = vpack.c.b16 %v1344, %v1340
    %v1385 = vpack.c.b16 %v1345, %v1341
    %v1386 = vpack.c.b16 %v1346, %v1342
    %v1387 = vpack.c.b16 %v1351, %v1347
    %v1388 = vpack.c.b16 %v1352, %v1348
    %v1389 = vpack.c.b16 %v1353, %v1349
    %v1390 = vpack.c.b16 %v1354, %v1350
    %v1391 = vpack.c.b16 %v1359, %v1355
    %v1392 = vpack.c.b16 %v1360, %v1356
    %v1393 = vpack.c.b16 %v1361, %v1357
    %v1394 = vpack.c.b16 %v1362, %v1358
    %1427 = vmatprep.subr.bf16.mxu0 %v1392
    %1428 = vmatpush1.bf16.msra.mxu0 %v1391
    %1429 = vmatprep.subr.bf16.mxu0 %v1388
    %1430 = vmatpush1.bf16.msra.mxu0 %v1387
    %1431 = vmatprep.subr.bf16.mxu0 %v1384
    %1432 = vmatpush1.bf16.msra.mxu0 %v1383
    %1433 = vmatprep.subr.bf16.mxu0 %v1380
    %1434 = vmatpush1.bf16.msra.mxu0 %v1379
    %1435 = vmatprep.subr.bf16.mxu0 %v1376
    %1436 = vmatpush1.bf16.msra.mxu0 %v1375
    %1437 = vmatprep.subr.bf16.mxu0 %v1372
    %1438 = vmatpush1.bf16.msra.mxu0 %v1371
    %1439 = vmatprep.subr.bf16.mxu0 %v1368
    %1440 = vmatpush1.bf16.msra.mxu0 %v1367
    %1441 = vmatprep.subr.bf16.mxu0 %v1364
    %1442 = vmatpush1.bf16.msra.mxu0 %v1363
    %1443 = vmatprep.subr.bf16.mxu0 0
    %1444 = vmatpush2.bf16.msra.mxu0 0
    %1445 = vmatprep.subr.bf16.mxu0 0
    %1446 = vmatpush2.bf16.msra.mxu0 0
    %1447 = vmatprep.subr.bf16.mxu0 0
    %1448 = vmatpush2.bf16.msra.mxu0 0
    %1449 = vmatprep.subr.bf16.mxu0 0
    %1450 = vmatpush2.bf16.msra.mxu0 0
    %1451 = vmatprep.subr.bf16.mxu0 0
    %1452 = vmatpush2.bf16.msra.mxu0 0
    %1453 = vmatprep.subr.bf16.mxu0 0
    %1454 = vmatpush2.bf16.msra.mxu0 0
    %1455 = vmatprep.subr.bf16.mxu0 0
    %1456 = vmatpush2.bf16.msra.mxu0 0
    %1457 = vmatprep.subr.bf16.mxu0 0
    %1458 = vmatpush2.bf16.msra.mxu0 0
    %1459 = vmatprep.mubr.bf16.mxu0 0
    %1460 = vmatmul.mubr.bf16.gmra.mxu0 %v1266
    %v1461 = vpop.f32.mrf.mxu0
    %v1462 = vadd.f32 0.0, %v1461
    %v1463 = vpop.f32.mrf.mxu0
    %v1464 = vadd.f32 0.0, %v1463
    %v1465 = vpop.f32.mrf.mxu0
    %v1466 = vpop.f32.mrf.mxu0
    %1467 = vdwg.mxu0
    %1468 = vmatprep.subr.bf16.mxu0 %v1394
    %1469 = vmatpush1.bf16.msra.mxu0 %v1393
    %1470 = vmatprep.subr.bf16.mxu0 %v1390
    %1471 = vmatpush1.bf16.msra.mxu0 %v1389
    %1472 = vmatprep.subr.bf16.mxu0 %v1386
    %1473 = vmatpush1.bf16.msra.mxu0 %v1385
    %1474 = vmatprep.subr.bf16.mxu0 %v1382
    %1475 = vmatpush1.bf16.msra.mxu0 %v1381
    %1476 = vmatprep.subr.bf16.mxu0 %v1378
    %1477 = vmatpush1.bf16.msra.mxu0 %v1377
    %1478 = vmatprep.subr.bf16.mxu0 %v1374
    %1479 = vmatpush1.bf16.msra.mxu0 %v1373
    %1480 = vmatprep.subr.bf16.mxu0 %v1370
    %1481 = vmatpush1.bf16.msra.mxu0 %v1369
    %1482 = vmatprep.subr.bf16.mxu0 %v1366
    %1483 = vmatpush1.bf16.msra.mxu0 %v1365
    %1484 = vmatprep.subr.bf16.mxu0 0
    %1485 = vmatpush2.bf16.msra.mxu0 0
    %1486 = vmatprep.subr.bf16.mxu0 0
    %1487 = vmatpush2.bf16.msra.mxu0 0
    %1488 = vmatprep.subr.bf16.mxu0 0
    %1489 = vmatpush2.bf16.msra.mxu0 0
    %1490 = vmatprep.subr.bf16.mxu0 0
    %1491 = vmatpush2.bf16.msra.mxu0 0
    %1492 = vmatprep.subr.bf16.mxu0 0
    %1493 = vmatpush2.bf16.msra.mxu0 0
    %1494 = vmatprep.subr.bf16.mxu0 0
    %1495 = vmatpush2.bf16.msra.mxu0 0
    %1496 = vmatprep.subr.bf16.mxu0 0
    %1497 = vmatpush2.bf16.msra.mxu0 0
    %1498 = vmatprep.subr.bf16.mxu0 0
    %1499 = vmatpush2.bf16.msra.mxu0 0
    %1500 = vmatprep.mubr.bf16.mxu0 0
    %1501 = vmatmul.mubr.bf16.gmra.mxu0 %v1266
    %v1502 = vpop.f32.mrf.mxu0
    %v1503 = vadd.f32 0.0, %v1502
    %v1504 = vpop.f32.mrf.mxu0
    %v1505 = vadd.f32 0.0, %v1504
    %v1506 = vpop.f32.mrf.mxu0
    %v1507 = vpop.f32.mrf.mxu0
    %1508 = vdwg.mxu0
    %v1509 = vadd.f32 %v1262, %v1462
    %v1510 = vadd.f32 %v1263, %v1464
    %v1511 = vadd.f32 %v1264, %v1503
    %v1512 = vadd.f32 %v1265, %v1505
    %v1513 = vxor.u32 %v1509, 2147483648
    %v1514 = vxor.u32 %v1510, 2147483648
    %v1515 = vmul.f32 %v1513, 1.442695
    %v1516 = vpow.pop %v1515
    %v1517 = vmul.f32 %v1514, 1.442695
    %v1518 = vpow.pop %v1517
    %v1519 = vadd.f32 %v1516, 1.0
    %v1520 = vadd.f32 %v1518, 1.0
    %v1521 = vrcp.pop %v1519
    %v1522 = vmul.f32 1.0, %v1521
    %v1523 = vrcp.pop %v1520
    %v1524 = vmul.f32 1.0, %v1523
    %v1525 = vtanh.pop %v1511
    %v1526 = vxor.u32 %v1512, 2147483648
    %v1527 = vmul.f32 %v1526, 1.442695
    %v1528 = vpow.pop %v1527
    %v1529 = vadd.f32 %v1528, 1.0
    %v1530 = vrcp.pop %v1529
    %v1531 = vmul.f32 1.0, %v1530
    %v1532 = vmul.f32 %v1524, %v1258
    %v1533 = vmul.f32 %v1522, %v1525
    %v1534 = vadd.f32 %v1532, %v1533
    %v1535 = vtanh.pop %v1534
    %v1536 = vmul.f32 %v1531, %v1535
  $region53: #{audio_dnn_forward.1} parent=0 // loop_footer
    %s1256 = sadd.s32 1, %s1252
  $region54: #{audio_dnn_forward.1} parent=0 // loop_footer_branch
    %1251 = sbr.rel target = $region50
  $region55: #{audio_dnn_forward.1} parent=0 // loop_exit
    _
  %1537 = vst [vmem:[%s1247] sm:$0xff] %v1257
  %1538 = vst [vmem:[%s1249] sm:$0xff] %v1258
  // Predicated region
  $region56: #{audio_dnn_forward.1} parent=0 // pred_check
    %p1539 = pneg %p33
  $region57: #{audio_dnn_forward.1} parent=0 // pred_check_branch
    %1541 = sbr.rel (%p1539) target = $region59
  $region58: #{audio_dnn_forward.1} parent=0 // pred_region
    %v1542 = vpack.c.bf16 %v1257, %v1257
    %v1543 = vld [vmem:[%s7] sm:$0xf]
    %v1544 = vld [vmem:[%s7 + $0x4] sm:$0xf]
    %v1545 = vld [vmem:[%s7 + $0x8] sm:$0xf]
    %v1546 = vld [vmem:[%s7 + $0xc] sm:$0xf]
    %v1547 = vld [vmem:[%s7 + $0x10] sm:$0xf]
    %v1548 = vld [vmem:[%s7 + $0x14] sm:$0xf]
    %v1549 = vld [vmem:[%s7 + $0x18] sm:$0xf]
    %v1550 = vld [vmem:[%s7 + $0x1c] sm:$0xf]
    %v1551 = vld [vmem:[%s7 + $0x20] sm:$0xf]
    %v1552 = vld [vmem:[%s7 + $0x24] sm:$0xf]
    %v1553 = vld [vmem:[%s7 + $0x28] sm:$0xf]
    %v1554 = vld [vmem:[%s7 + $0x2c] sm:$0xf]
    %v1555 = vld [vmem:[%s7 + $0x30] sm:$0xf]
    %v1556 = vld [vmem:[%s7 + $0x34] sm:$0xf]
    %v1557 = vld [vmem:[%s7 + $0x38] sm:$0xf]
    %v1558 = vld [vmem:[%s7 + $0x3c] sm:$0xf]
    %v1559 = vld [vmem:[%s8] sm:$0x1]
    %v1561 = vlaneseq
    %v1562 = vshrl.u32 %v1561, 7
    %v1563 = vsub.s32 0, %v1562
    %v1564 = vrot.slane %v1559, %v1563
    %v1582 = vunpack.c.l.b16 %v1543
    %v1583 = vunpack.c.l.b16 %v1544
    %v1584 = vunpack.c.l.b16 %v1545
    %v1585 = vunpack.c.l.b16 %v1546
    %v1586 = vunpack.c.l.b16 %v1547
    %v1587 = vunpack.c.l.b16 %v1548
    %v1588 = vunpack.c.l.b16 %v1549
    %v1589 = vunpack.c.l.b16 %v1550
    %v1590 = vunpack.c.l.b16 %v1551
    %v1591 = vunpack.c.l.b16 %v1552
    %v1592 = vunpack.c.l.b16 %v1553
    %v1593 = vunpack.c.l.b16 %v1554
    %v1594 = vunpack.c.l.b16 %v1555
    %v1595 = vunpack.c.l.b16 %v1556
    %v1596 = vunpack.c.l.b16 %v1557
    %v1597 = vunpack.c.l.b16 %v1558
    %v1598 = vpack.c.b16 %v1583, %v1582
    %v1599 = vpack.c.b16 %v1585, %v1584
    %v1600 = vpack.c.b16 %v1587, %v1586
    %v1601 = vpack.c.b16 %v1589, %v1588
    %v1602 = vpack.c.b16 %v1591, %v1590
    %v1603 = vpack.c.b16 %v1593, %v1592
    %v1604 = vpack.c.b16 %v1595, %v1594
    %v1605 = vpack.c.b16 %v1597, %v1596
    %1614 = vmatprep.subr.bf16.mxu0 0
    %1615 = vmatpush1.bf16.msra.mxu0 %v1605
    %1616 = vmatprep.subr.bf16.mxu0 0
    %1617 = vmatpush1.bf16.msra.mxu0 %v1604
    %1618 = vmatprep.subr.bf16.mxu0 0
    %1619 = vmatpush1.bf16.msra.mxu0 %v1603
    %1620 = vmatprep.subr.bf16.mxu0 0
    %1621 = vmatpush1.bf16.msra.mxu0 %v1602
    %1622 = vmatprep.subr.bf16.mxu0 0
    %1623 = vmatpush1.bf16.msra.mxu0 %v1601
    %1624 = vmatprep.subr.bf16.mxu0 0
    %1625 = vmatpush1.bf16.msra.mxu0 %v1600
    %1626 = vmatprep.subr.bf16.mxu0 0
    %1627 = vmatpush1.bf16.msra.mxu0 %v1599
    %1628 = vmatprep.subr.bf16.mxu0 0
    %1629 = vmatpush1.bf16.msra.mxu0 %v1598
    %1630 = vmatprep.subr.bf16.mxu0 0
    %1631 = vmatpush2.bf16.msra.mxu0 0
    %1632 = vmatprep.subr.bf16.mxu0 0
    %1633 = vmatpush2.bf16.msra.mxu0 0
    %1634 = vmatprep.subr.bf16.mxu0 0
    %1635 = vmatpush2.bf16.msra.mxu0 0
    %1636 = vmatprep.subr.bf16.mxu0 0
    %1637 = vmatpush2.bf16.msra.mxu0 0
    %1638 = vmatprep.subr.bf16.mxu0 0
    %1639 = vmatpush2.bf16.msra.mxu0 0
    %1640 = vmatprep.subr.bf16.mxu0 0
    %1641 = vmatpush2.bf16.msra.mxu0 0
    %1642 = vmatprep.subr.bf16.mxu0 0
    %1643 = vmatpush2.bf16.msra.mxu0 0
    %1644 = vmatprep.subr.bf16.mxu0 0
    %1645 = vmatpush2.bf16.msra.mxu0 0
    %1646 = vmatprep.mubr.bf16.mxu0 0
    %1647 = vmatmul.mubr.bf16.gmra.mxu0 %v1542
    %v1648 = vpop.f32.mrf.mxu0
    %v1649 = vadd.f32 %v1564, %v1648
    %v1650 = vpop.f32.mrf.mxu0
    %v1651 = vpop.f32.mrf.mxu0
    %v1652 = vpop.f32.mrf.mxu0
    %1653 = vdwg.mxu0
    %1654 = vst [vmem:[%s9] sm:$0xff] %v1649
  $region59: #{audio_dnn_forward.1} parent=0 // pred_fallthru
    _
  // Predicated region
  $region60: #{audio_dnn_forward.1} parent=0 // pred_check
    _
  $region61: #{audio_dnn_forward.1} parent=0 // pred_check_branch
    %1656 = sbr.rel (0) target = $region63
  $region62: #{audio_dnn_forward.1} parent=0 // pred_region
    _
  $region63: #{audio_dnn_forward.1} parent=0 // pred_fallthru
    _
  // Predicated region
  $region64: #{audio_dnn_forward.1} parent=0 // pred_check
    _
  $region65: #{audio_dnn_forward.1} parent=0 // pred_check_branch
    %1658 = sbr.rel (0) target = $region67
  $region66: #{audio_dnn_forward.1} parent=0 // pred_region
    _
  $region67: #{audio_dnn_forward.1} parent=0 // pred_fallthru
    _

</llo_original>
